<compile_context>
chip_gen: v6e
topology: v6e:2x2x1
jax: 0.10.0
libtpu: 0.0.40
codegen_flags: <defaults>
</compile_context>

<pallas_src>
import functools

import jax
import jax.numpy as jnp
import numpy as np
from jax import lax
from jax.experimental import pallas as pl
from jax.experimental.pallas import tpu as pltpu


# ----------------------------------------------------------------------------- kernel
def _stack_kernel(*refs, H, W, channels):
    """Fused ResidualStack for one batch image, W*C lane-packed layout.

    refs = (xp_ref, w0_blk0, w1_blk0, w0_blk1, w1_blk1, ..., o_ref)
      xp_ref: (1, H+2, (W+2)*Cin0)   spatially padded input, (w, c) packed on lanes
      w0_blk: (9*W*Ci, W*Co)         block-diagonal conv0 weights
      w1_blk: (9*W*Co [+ W*Ci], W*Co) block-diag conv1 weights (++ skip proj if Ci!=Co)
      o_ref:  (H, W*Cfinal)          lane-dense output tile
    """
    num_blocks = len(channels) - 1
    xp_ref = refs[0]
    w_refs = refs[1:1 + 2 * num_blocks]
    o_ref = refs[1 + 2 * num_blocks]

    Cin0 = channels[0]
    xp = xp_ref[0]                                            # (H+2, (W+2)*Cin0)
    cur_pad = xp                                              # padded, packed activation
    cur_raw = xp[1:H + 1, Cin0:Cin0 + W * Cin0]               # interior, for the skip

    r = None
    for blk in range(num_blocks):
        Ci, Co = channels[blk], channels[blk + 1]
        w0 = w_refs[2 * blk][...]
        w1 = w_refs[2 * blk + 1][...]

        # ---- conv0 (3x3, SAME) as a single im2col matmul, then ReLU -------------
        cols0 = [cur_pad[dy:dy + H, dx * Ci:dx * Ci + W * Ci]       # (H, W*Ci) per tap
                 for dy in range(3) for dx in range(3)]
        p0 = jnp.concatenate(cols0, axis=1)                         # (H, 9*W*Ci)
        y = jnp.maximum(jnp.dot(p0, w0, preferred_element_type=jnp.float32), 0.0)

        # ---- zero halo for conv1 (intermediate never leaves the core) -----------
        zc = jnp.zeros((H, Co), jnp.float32)
        zr = jnp.zeros((1, (W + 2) * Co), jnp.float32)
        ypad = jnp.concatenate([zr, jnp.concatenate([zc, y, zc], axis=1), zr], axis=0)

        # ---- conv1 (+ skip) ------------------------------------------------------
        cols1 = [ypad[dy:dy + H, dx * Co:dx * Co + W * Co]          # (H, W*Co) per tap
                 for dy in range(3) for dx in range(3)]
        if Ci != Co:
            # channel-zero-padded skip folded into the matmul via the augmented w1
            cols1.append(cur_raw)                                   # (H, W*Ci)
            p1 = jnp.concatenate(cols1, axis=1)                     # (H, 9*W*Co + W*Ci)
            z = jnp.dot(p1, w1, preferred_element_type=jnp.float32)
        else:
            # identity skip: cheap VPU add of the already-resident activation
            p1 = jnp.concatenate(cols1, axis=1)                     # (H, 9*W*Co)
            z = jnp.dot(p1, w1, preferred_element_type=jnp.float32) + cur_raw
        r = jnp.maximum(z, 0.0)                                     # (H, W*Co)

        # ---- feed the next block (stays in VMEM/vregs, never HBM) ---------------
        if blk + 1 < num_blocks:
            zc2 = jnp.zeros((H, Co), jnp.float32)
            zr2 = jnp.zeros((1, (W + 2) * Co), jnp.float32)
            cur_pad = jnp.concatenate(
                [zr2, jnp.concatenate([zc2, r, zc2], axis=1), zr2], axis=0)
            cur_raw = r

    o_ref[...] = r.astype(o_ref.dtype)                              # full-lane vst


# ------------------------------------------------------------------ wrapper helpers
def _block_diag_weights(w_hwio, W):
    """(3,3,Ci,Co) -> (9*W*Ci, W*Co): kron(I_W, w[dy,dx]) stacked over the 9 taps."""
    _, _, Ci, Co = w_hwio.shape
    taps = w_hwio.reshape(9, Ci, Co)
    eye = jnp.eye(W, dtype=w_hwio.dtype)
    bd = jnp.einsum('vw,tio->tviwo', eye, taps)               # (9, W, Ci, W, Co)
    return bd.reshape(9 * W * Ci, W * Co)


def _skip_projection(W, Cin, Cout, dtype):
    """(W*Cin, W*Cout): repacks the (w, ci) skip slice into (w, co), zero-padding channels."""
    proj = jnp.einsum('vw,io->viwo',
                      jnp.eye(W, dtype=dtype), jnp.eye(Cin, Cout, dtype=dtype))
    return proj.reshape(W * Cin, W * Cout)


@jax.jit
def residual_stack_forward(x_nchw, block_weights):
    """ResidualStack forward (dense=False): one fused Pallas kernel for the whole stack."""
    B, Cin0, H, W = x_nchw.shape
    channels = [Cin0] + [w0.shape[-1] for w0, _ in block_weights]
    Cfin = channels[-1]

    # NCHW -> NHWC, spatial SAME padding + W*C lane packing (wrapper-side XLA glue)
    x = jnp.transpose(x_nchw, (0, 2, 3, 1))
    xp = jnp.pad(x, ((0, 0), (1, 1), (1, 1), (0, 0))).reshape(B, H + 2, (W + 2) * Cin0)

    packed_w, w_specs = [], []
    flops = 0
    for blk, (w0, w1) in enumerate(block_weights):
        Ci, Co = channels[blk], channels[blk + 1]
        w0_bd = _block_diag_weights(w0, W)                    # (9*W*Ci, W*Co)
        w1_bd = _block_diag_weights(w1, W)                    # (9*W*Co, W*Co)
        if Ci != Co:
            w1_bd = jnp.concatenate(
                [w1_bd, _skip_projection(W, Ci, Co, w1_bd.dtype)], axis=0)
        packed_w += [w0_bd, w1_bd]
        w_specs += [pl.BlockSpec(w0_bd.shape, lambda b: (0, 0)),
                    pl.BlockSpec(w1_bd.shape, lambda b: (0, 0))]
        flops += 2 * B * H * (w0_bd.shape[0] * w0_bd.shape[1]
                              + w1_bd.shape[0] * w1_bd.shape[1])

    bytes_accessed = 4 * (xp.size + sum(int(w.size) for w in packed_w)
                          + B * H * W * Cfin)

    kernel = functools.partial(_stack_kernel, H=H, W=W, channels=tuple(channels))

    out = pl.pallas_call(
        kernel,
        out_shape=jax.ShapeDtypeStruct((B * H, W * Cfin), jnp.float32),
        grid=(B,),
        in_specs=[pl.BlockSpec((1, H + 2, (W + 2) * Cin0), lambda b: (b, 0, 0))]
                 + w_specs,
        out_specs=pl.BlockSpec((H, W * Cfin), lambda b: (b, 0)),
        compiler_params=pltpu.CompilerParams(
            dimension_semantics=("parallel",),
            vmem_limit_bytes=64 * 1024 * 1024,
        ),
        cost_estimate=pl.CostEstimate(
            flops=flops, transcendentals=0, bytes_accessed=bytes_accessed),
    )(xp, *packed_w)

    out = out.reshape(B, H, W, Cfin)
    return jnp.transpose(out, (0, 3, 1, 2))                   # back to NCHW


# --------------------------------------------------------------------- pure-JAX ref
def _reference_block(x_nchw, w0_hwio, w1_hwio):
    Cin = x_nchw.shape[1]
    Cout = w0_hwio.shape[-1]
    w0 = jnp.transpose(w0_hwio, (3, 2, 0, 1))                 # OIHW
    w1 = jnp.transpose(w1_hwio, (3, 2, 0, 1))
    dn = ('NCHW', 'OIHW', 'NCHW')
    y = lax.conv_general_dilated(x_nchw, w0, (1, 1), 'SAME', dimension_numbers=dn)
    y = jnp.maximum(y, 0.0)
    z = lax.conv_general_dilated(y, w1, (1, 1), 'SAME', dimension_numbers=dn)
    skip = x_nchw if Cin == Cout else jnp.pad(
        x_nchw, ((0, 0), (0, Cout - Cin), (0, 0), (0, 0)))
    return jnp.maximum(z + skip, 0.0)


def reference_forward(x_nchw, block_weights):
    out = x_nchw
    for w0, w1 in block_weights:
        out = _reference_block(out, w0, w1)
    return out


# -------------------------------------------------------------------------- driver
if __name__ == "__main__":
    B, Cin, Cout, H, W = 2, 4, 8, 16, 16
    num_blocks = 2

    keys = jax.random.split(jax.random.PRNGKey(0), 1 + 2 * num_blocks)
    x = jax.random.normal(keys[0], (B, Cin, H, W), jnp.float32)

    # Deterministic synthetic Conv2d(bias=False) weights, stored HWIO (3,3,Ci,Co).
    block_weights = []
    c_in = Cin
    for i in range(num_blocks):
        w0 = jax.random.normal(keys[1 + 2 * i], (3, 3, c_in, Cout),
                               jnp.float32) * (1.0 / np.sqrt(9 * c_in))
        w1 = jax.random.normal(keys[2 + 2 * i], (3, 3, Cout, Cout),
                               jnp.float32) * (1.0 / np.sqrt(9 * Cout))
        block_weights.append((w0, w1))
        c_in = Cout

    out = jax.block_until_ready(residual_stack_forward(x, block_weights))
    ref = reference_forward(x, block_weights)
    np.testing.assert_allclose(np.asarray(out), np.asarray(ref), rtol=1e-3, atol=1e-3)
    print("KERNEL_OK")
</pallas_src>

<mosaic_0001>
module attributes {stable_mosaic.version = 11 : i64} {
  func.func @_stack_kernel(%arg0: i32, %arg1: memref<1x18x72xf32, #tpu.memory_space<vmem>>, %arg2: memref<576x128xf32, #tpu.memory_space<vmem>>, %arg3: memref<1216x128xf32, #tpu.memory_space<vmem>>, %arg4: memref<1152x128xf32, #tpu.memory_space<vmem>>, %arg5: memref<1152x128xf32, #tpu.memory_space<vmem>>, %arg6: memref<16x128xf32, #tpu.memory_space<vmem>>) attributes {dimension_semantics = [#tpu.dimension_semantics<parallel>], iteration_bounds = array<i64: 2>, scalar_prefetch = 0 : i64, scratch_operands = 0 : i64, tpu.core_type = #tpu.core_type<tc>, window_params = [{transform_indices = @transform_0, window_bounds = array<i64: 1, 18, 72>}, {pipeline_mode = #tpu.pipeline_mode<synchronous>, transform_indices = @transform_1, window_bounds = array<i64: 576, 128>}, {pipeline_mode = #tpu.pipeline_mode<synchronous>, transform_indices = @transform_2, window_bounds = array<i64: 1216, 128>}, {pipeline_mode = #tpu.pipeline_mode<synchronous>, transform_indices = @transform_3, window_bounds = array<i64: 1152, 128>}, {pipeline_mode = #tpu.pipeline_mode<synchronous>, transform_indices = @transform_4, window_bounds = array<i64: 1152, 128>}, {transform_indices = @transform_5, window_bounds = array<i64: 16, 128>}]} {
    %c0 = arith.constant 0 : index
    %c0_0 = arith.constant 0 : index
    %c0_1 = arith.constant 0 : index
    %0 = vector.load %arg1[%c0, %c0_0, %c0_1] : memref<1x18x72xf32, #tpu.memory_space<vmem>>, vector<1x18x72xf32>
    %1 = vector.shape_cast %0 : vector<1x18x72xf32> to vector<18x72xf32>
    %2 = vector.extract_strided_slice %1 {offsets = [1, 4], sizes = [16, 64], strides = [1, 1]} : vector<18x72xf32> to vector<16x64xf32>
    %c0_2 = arith.constant 0 : index
    %c0_3 = arith.constant 0 : index
    %3 = vector.load %arg2[%c0_2, %c0_3] : memref<576x128xf32, #tpu.memory_space<vmem>>, vector<576x128xf32>
    %c0_4 = arith.constant 0 : index
    %c0_5 = arith.constant 0 : index
    %4 = vector.load %arg3[%c0_4, %c0_5] : memref<1216x128xf32, #tpu.memory_space<vmem>>, vector<1216x128xf32>
    %5 = vector.extract_strided_slice %1 {offsets = [0, 0], sizes = [16, 64], strides = [1, 1]} : vector<18x72xf32> to vector<16x64xf32>
    %6 = vector.extract_strided_slice %1 {offsets = [0, 4], sizes = [16, 64], strides = [1, 1]} : vector<18x72xf32> to vector<16x64xf32>
    %7 = vector.extract_strided_slice %1 {offsets = [0, 8], sizes = [16, 64], strides = [1, 1]} : vector<18x72xf32> to vector<16x64xf32>
    %8 = vector.extract_strided_slice %1 {offsets = [1, 0], sizes = [16, 64], strides = [1, 1]} : vector<18x72xf32> to vector<16x64xf32>
    %9 = vector.extract_strided_slice %1 {offsets = [1, 4], sizes = [16, 64], strides = [1, 1]} : vector<18x72xf32> to vector<16x64xf32>
    %10 = vector.extract_strided_slice %1 {offsets = [1, 8], sizes = [16, 64], strides = [1, 1]} : vector<18x72xf32> to vector<16x64xf32>
    %11 = vector.extract_strided_slice %1 {offsets = [2, 0], sizes = [16, 64], strides = [1, 1]} : vector<18x72xf32> to vector<16x64xf32>
    %12 = vector.extract_strided_slice %1 {offsets = [2, 4], sizes = [16, 64], strides = [1, 1]} : vector<18x72xf32> to vector<16x64xf32>
    %13 = vector.extract_strided_slice %1 {offsets = [2, 8], sizes = [16, 64], strides = [1, 1]} : vector<18x72xf32> to vector<16x64xf32>
    %14 = tpu.concatenate %5, %6, %7, %8, %9, %10, %11, %12, %13 in 1 : vector<16x64xf32>, vector<16x64xf32>, vector<16x64xf32>, vector<16x64xf32>, vector<16x64xf32>, vector<16x64xf32>, vector<16x64xf32>, vector<16x64xf32>, vector<16x64xf32> -> vector<16x576xf32>
    %cst = arith.constant dense<0.000000e+00> : vector<16x128xf32>
    %15 = tpu.matmul %14, %3, %cst {dimension_numbers = #tpu.dot_dimension_numbers<[1], [0], [0], [1], [0, 0, 1, 1], [], []>} : vector<16x576xf32>, vector<576x128xf32>, vector<16x128xf32> -> vector<16x128xf32>
    %cst_6 = arith.constant 0.000000e+00 : f32
    %16 = vector.broadcast %cst_6 : f32 to vector<16x128xf32>
    %17 = arith.maximumf %15, %16 : vector<16x128xf32>
    %cst_7 = arith.constant 0.000000e+00 : f32
    %18 = vector.broadcast %cst_7 : f32 to vector<16x8xf32>
    %cst_8 = arith.constant 0.000000e+00 : f32
    %19 = vector.broadcast %cst_8 : f32 to vector<1x144xf32>
    %20 = tpu.concatenate %18, %17, %18 in 1 : vector<16x8xf32>, vector<16x128xf32>, vector<16x8xf32> -> vector<16x144xf32>
    %21 = tpu.concatenate %19, %20, %19 in 0 : vector<1x144xf32>, vector<16x144xf32>, vector<1x144xf32> -> vector<18x144xf32>
    %22 = vector.extract_strided_slice %21 {offsets = [0, 0], sizes = [16, 128], strides = [1, 1]} : vector<18x144xf32> to vector<16x128xf32>
    %23 = vector.extract_strided_slice %21 {offsets = [0, 8], sizes = [16, 128], strides = [1, 1]} : vector<18x144xf32> to vector<16x128xf32>
    %24 = vector.extract_strided_slice %21 {offsets = [0, 16], sizes = [16, 128], strides = [1, 1]} : vector<18x144xf32> to vector<16x128xf32>
    %25 = vector.extract_strided_slice %21 {offsets = [1, 0], sizes = [16, 128], strides = [1, 1]} : vector<18x144xf32> to vector<16x128xf32>
    %26 = vector.extract_strided_slice %21 {offsets = [1, 8], sizes = [16, 128], strides = [1, 1]} : vector<18x144xf32> to vector<16x128xf32>
    %27 = vector.extract_strided_slice %21 {offsets = [1, 16], sizes = [16, 128], strides = [1, 1]} : vector<18x144xf32> to vector<16x128xf32>
    %28 = vector.extract_strided_slice %21 {offsets = [2, 0], sizes = [16, 128], strides = [1, 1]} : vector<18x144xf32> to vector<16x128xf32>
    %29 = vector.extract_strided_slice %21 {offsets = [2, 8], sizes = [16, 128], strides = [1, 1]} : vector<18x144xf32> to vector<16x128xf32>
    %30 = vector.extract_strided_slice %21 {offsets = [2, 16], sizes = [16, 128], strides = [1, 1]} : vector<18x144xf32> to vector<16x128xf32>
    %31 = tpu.concatenate %22, %23, %24, %25, %26, %27, %28, %29, %30, %2 in 1 : vector<16x128xf32>, vector<16x128xf32>, vector<16x128xf32>, vector<16x128xf32>, vector<16x128xf32>, vector<16x128xf32>, vector<16x128xf32>, vector<16x128xf32>, vector<16x128xf32>, vector<16x64xf32> -> vector<16x1216xf32>
    %cst_9 = arith.constant dense<0.000000e+00> : vector<16x128xf32>
    %32 = tpu.matmul %31, %4, %cst_9 {dimension_numbers = #tpu.dot_dimension_numbers<[1], [0], [0], [1], [0, 0, 1, 1], [], []>} : vector<16x1216xf32>, vector<1216x128xf32>, vector<16x128xf32> -> vector<16x128xf32>
    %cst_10 = arith.constant 0.000000e+00 : f32
    %33 = vector.broadcast %cst_10 : f32 to vector<16x128xf32>
    %34 = arith.maximumf %32, %33 : vector<16x128xf32>
    %cst_11 = arith.constant 0.000000e+00 : f32
    %35 = vector.broadcast %cst_11 : f32 to vector<16x8xf32>
    %cst_12 = arith.constant 0.000000e+00 : f32
    %36 = vector.broadcast %cst_12 : f32 to vector<1x144xf32>
    %37 = tpu.concatenate %35, %34, %35 in 1 : vector<16x8xf32>, vector<16x128xf32>, vector<16x8xf32> -> vector<16x144xf32>
    %38 = tpu.concatenate %36, %37, %36 in 0 : vector<1x144xf32>, vector<16x144xf32>, vector<1x144xf32> -> vector<18x144xf32>
    %c0_13 = arith.constant 0 : index
    %c0_14 = arith.constant 0 : index
    %39 = vector.load %arg4[%c0_13, %c0_14] : memref<1152x128xf32, #tpu.memory_space<vmem>>, vector<1152x128xf32>
    %c0_15 = arith.constant 0 : index
    %c0_16 = arith.constant 0 : index
    %40 = vector.load %arg5[%c0_15, %c0_16] : memref<1152x128xf32, #tpu.memory_space<vmem>>, vector<1152x128xf32>
    %41 = vector.extract_strided_slice %38 {offsets = [0, 0], sizes = [16, 128], strides = [1, 1]} : vector<18x144xf32> to vector<16x128xf32>
    %42 = vector.extract_strided_slice %38 {offsets = [0, 8], sizes = [16, 128], strides = [1, 1]} : vector<18x144xf32> to vector<16x128xf32>
    %43 = vector.extract_strided_slice %38 {offsets = [0, 16], sizes = [16, 128], strides = [1, 1]} : vector<18x144xf32> to vector<16x128xf32>
    %44 = vector.extract_strided_slice %38 {offsets = [1, 0], sizes = [16, 128], strides = [1, 1]} : vector<18x144xf32> to vector<16x128xf32>
    %45 = vector.extract_strided_slice %38 {offsets = [1, 8], sizes = [16, 128], strides = [1, 1]} : vector<18x144xf32> to vector<16x128xf32>
    %46 = vector.extract_strided_slice %38 {offsets = [1, 16], sizes = [16, 128], strides = [1, 1]} : vector<18x144xf32> to vector<16x128xf32>
    %47 = vector.extract_strided_slice %38 {offsets = [2, 0], sizes = [16, 128], strides = [1, 1]} : vector<18x144xf32> to vector<16x128xf32>
    %48 = vector.extract_strided_slice %38 {offsets = [2, 8], sizes = [16, 128], strides = [1, 1]} : vector<18x144xf32> to vector<16x128xf32>
    %49 = vector.extract_strided_slice %38 {offsets = [2, 16], sizes = [16, 128], strides = [1, 1]} : vector<18x144xf32> to vector<16x128xf32>
    %50 = tpu.concatenate %41, %42, %43, %44, %45, %46, %47, %48, %49 in 1 : vector<16x128xf32>, vector<16x128xf32>, vector<16x128xf32>, vector<16x128xf32>, vector<16x128xf32>, vector<16x128xf32>, vector<16x128xf32>, vector<16x128xf32>, vector<16x128xf32> -> vector<16x1152xf32>
    %cst_17 = arith.constant dense<0.000000e+00> : vector<16x128xf32>
    %51 = tpu.matmul %50, %39, %cst_17 {dimension_numbers = #tpu.dot_dimension_numbers<[1], [0], [0], [1], [0, 0, 1, 1], [], []>} : vector<16x1152xf32>, vector<1152x128xf32>, vector<16x128xf32> -> vector<16x128xf32>
    %cst_18 = arith.constant 0.000000e+00 : f32
    %52 = vector.broadcast %cst_18 : f32 to vector<16x128xf32>
    %53 = arith.maximumf %51, %52 : vector<16x128xf32>
    %cst_19 = arith.constant 0.000000e+00 : f32
    %54 = vector.broadcast %cst_19 : f32 to vector<16x8xf32>
    %cst_20 = arith.constant 0.000000e+00 : f32
    %55 = vector.broadcast %cst_20 : f32 to vector<1x144xf32>
    %56 = tpu.concatenate %54, %53, %54 in 1 : vector<16x8xf32>, vector<16x128xf32>, vector<16x8xf32> -> vector<16x144xf32>
    %57 = tpu.concatenate %55, %56, %55 in 0 : vector<1x144xf32>, vector<16x144xf32>, vector<1x144xf32> -> vector<18x144xf32>
    %58 = vector.extract_strided_slice %57 {offsets = [0, 0], sizes = [16, 128], strides = [1, 1]} : vector<18x144xf32> to vector<16x128xf32>
    %59 = vector.extract_strided_slice %57 {offsets = [0, 8], sizes = [16, 128], strides = [1, 1]} : vector<18x144xf32> to vector<16x128xf32>
    %60 = vector.extract_strided_slice %57 {offsets = [0, 16], sizes = [16, 128], strides = [1, 1]} : vector<18x144xf32> to vector<16x128xf32>
    %61 = vector.extract_strided_slice %57 {offsets = [1, 0], sizes = [16, 128], strides = [1, 1]} : vector<18x144xf32> to vector<16x128xf32>
    %62 = vector.extract_strided_slice %57 {offsets = [1, 8], sizes = [16, 128], strides = [1, 1]} : vector<18x144xf32> to vector<16x128xf32>
    %63 = vector.extract_strided_slice %57 {offsets = [1, 16], sizes = [16, 128], strides = [1, 1]} : vector<18x144xf32> to vector<16x128xf32>
    %64 = vector.extract_strided_slice %57 {offsets = [2, 0], sizes = [16, 128], strides = [1, 1]} : vector<18x144xf32> to vector<16x128xf32>
    %65 = vector.extract_strided_slice %57 {offsets = [2, 8], sizes = [16, 128], strides = [1, 1]} : vector<18x144xf32> to vector<16x128xf32>
    %66 = vector.extract_strided_slice %57 {offsets = [2, 16], sizes = [16, 128], strides = [1, 1]} : vector<18x144xf32> to vector<16x128xf32>
    %67 = tpu.concatenate %58, %59, %60, %61, %62, %63, %64, %65, %66 in 1 : vector<16x128xf32>, vector<16x128xf32>, vector<16x128xf32>, vector<16x128xf32>, vector<16x128xf32>, vector<16x128xf32>, vector<16x128xf32>, vector<16x128xf32>, vector<16x128xf32> -> vector<16x1152xf32>
    %cst_21 = arith.constant dense<0.000000e+00> : vector<16x128xf32>
    %68 = tpu.matmul %67, %40, %cst_21 {dimension_numbers = #tpu.dot_dimension_numbers<[1], [0], [0], [1], [0, 0, 1, 1], [], []>} : vector<16x1152xf32>, vector<1152x128xf32>, vector<16x128xf32> -> vector<16x128xf32>
    %69 = arith.addf %68, %34 : vector<16x128xf32>
    %cst_22 = arith.constant 0.000000e+00 : f32
    %70 = vector.broadcast %cst_22 : f32 to vector<16x128xf32>
    %71 = arith.maximumf %69, %70 : vector<16x128xf32>
    %c0_23 = arith.constant 0 : index
    %c0_24 = arith.constant 0 : index
    %72 = vector.load %arg6[%c0_23, %c0_24] : memref<16x128xf32, #tpu.memory_space<vmem>>, vector<16x128xf32>
    tpu.vector_store %arg6[%c0_23, %c0_24], %71 {strides = array<i32>} : memref<16x128xf32, #tpu.memory_space<vmem>>, vector<16x128xf32>,
    return
  }
  func.func @transform_0(%arg0: i32) -> (i32, i32, i32) {
    %c0_i32 = arith.constant 0 : i32
    %c0_i32_0 = arith.constant 0 : i32
    %c0_i32_1 = arith.constant 0 : i32
    return %arg0, %c0_i32, %c0_i32_0 : i32, i32, i32
  }
  func.func @transform_1(%arg0: i32) -> (i32, i32) {
    %c0_i32 = arith.constant 0 : i32
    %c0_i32_0 = arith.constant 0 : i32
    %c0_i32_1 = arith.constant 0 : i32
    return %c0_i32, %c0_i32_0 : i32, i32
  }
  func.func @transform_2(%arg0: i32) -> (i32, i32) {
    %c0_i32 = arith.constant 0 : i32
    %c0_i32_0 = arith.constant 0 : i32
    %c0_i32_1 = arith.constant 0 : i32
    return %c0_i32, %c0_i32_0 : i32, i32
  }
  func.func @transform_3(%arg0: i32) -> (i32, i32) {
    %c0_i32 = arith.constant 0 : i32
    %c0_i32_0 = arith.constant 0 : i32
    %c0_i32_1 = arith.constant 0 : i32
    return %c0_i32, %c0_i32_0 : i32, i32
  }
  func.func @transform_4(%arg0: i32) -> (i32, i32) {
    %c0_i32 = arith.constant 0 : i32
    %c0_i32_0 = arith.constant 0 : i32
    %c0_i32_1 = arith.constant 0 : i32
    return %c0_i32, %c0_i32_0 : i32, i32
  }
  func.func @transform_5(%arg0: i32) -> (i32, i32) {
    %c0_i32 = arith.constant 0 : i32
    %c0_i32_0 = arith.constant 0 : i32
    return %arg0, %c0_i32 : i32, i32
  }
}

</mosaic_0001>

<llo_original>
// kernel: residual_stack_forward.1
$region0: #{residual_stack_forward.1}
  #allocation0 [shape = 'u32[]', space=smem, size = 0x4, offset = 0x4, fixed_abs, tag = 'smem constant byte address 0x4 - core index']
  #allocation1 [shape = 'u32[144,128]{1,0:T(1,128)}', space=vmem, size = 0x12000, scoped, tag = 'internal scratch']
  %s0 = inlined_call_operand.vmem [shape: f32[2,18,72], index: 0, kind: input, shape index: {}]
  %s1 = inlined_call_operand.vmem [shape: f32[576,128], index: 1, kind: input, shape index: {}]
  %s2 = inlined_call_operand.vmem [shape: f32[1216,128], index: 2, kind: input, shape index: {}]
  %s3 = inlined_call_operand.vmem [shape: f32[1152,128], index: 3, kind: input, shape index: {}]
  %s4 = inlined_call_operand.vmem [shape: f32[1152,128], index: 4, kind: input, shape index: {}]
  %s5 = inlined_call_operand.vmem [shape: f32[32,128], index: 5, kind: output, shape index: {}]
  %s6 = sld [smem:[#allocation0]]
  $region53: #{residual_stack_forward.1} parent=0
    _
  %s8 = ssub.s32 1, %s6
  %s9 = scalar_select 0, %s8, %s6
  loop: start=0, step=1, limit=4
  $region2: #{residual_stack_forward.1} parent=0 // loop_pre_header
    _
  $region3: #{residual_stack_forward.1} parent=0 // loop_header
    %s11 = sphi 0, %s15
    %p12 = scmp.ge.s32.totalorder %s11, 4
    %s21 = sphi 0, %s23
    %s24 = sphi 0, %s21
    %s25 = sphi 0, %s24
    %s41 = sphi 0, %s25
    %s45 = sphi 0, %s45
    %s47 = sphi 0, %s45
    %s48 = sphi 0, %s47
    %s62 = sphi 0, %s48
    %s66 = sphi 0, %s66
    %s68 = sphi 0, %s66
    %s69 = sphi 0, %s68
    %s83 = sphi 0, %s69
    %s87 = sphi 0, %s87
    %s89 = sphi 0, %s87
    %s90 = sphi 0, %s89
    %s104 = sphi 0, %s90
    %s108 = sphi 0, %s108
    %s110 = sphi 0, %s108
    %s111 = sphi 0, %s110
    %s125 = sphi 0, %s111
    %s131 = sphi 0, %s133
    %s134 = sphi 0, %s131
    %s135 = sphi 0, %s134
    %s151 = sphi 0, %s135
  $region4: #{residual_stack_forward.1} parent=0 // loop_header_branch
    %14 = sbr.rel (%p12) target = $region8
  $region5: #{residual_stack_forward.1} parent=0 // loop_body
    %s16 = ssub.s32 %s11, 1
    %s17 = ssub.s32 %s11, 2
    %s18 = sadd.s32 %s11, 1
    %s19 = ssub.s32 %s11, %s18
    %p20 = scmp.eq.s32.totalorder %s19, 0
    %s22 = sadd.s32 %s21, 1
    %s23 = scalar_select %p20, %s21, %s22
    %p26 = pneg %p20
    %p27 = scmp.eq.s32.totalorder %s11, 1
    %p28 = por %p26, %p27
    %p29 = scmp.ne.s32.totalorder %s21, %s24
    %p30 = scmp.eq.s32.totalorder %s11, 0
    %p31 = por %p29, %p30
    %p32 = scmp.ne.s32.totalorder %s21, %s24
    %p33 = scmp.eq.s32.totalorder %s16, 1
    %p34 = por %p32, %p33
    %p35 = scmp.ne.s32.totalorder %s24, %s25
    %p36 = scmp.eq.s32.totalorder %s16, 0
    %p37 = por %p35, %p36
    %p38 = scmp.ne.s32.totalorder %s24, %s25
    %p39 = scmp.eq.s32.totalorder %s17, 1
    %p40 = por %p38, %p39
    %p42 = scmp.ne.s32.totalorder %s25, %s41
    %p43 = scmp.eq.s32.totalorder %s17, 0
    %p44 = por %p42, %p43
    %s46 = sadd.s32 %s45, 1
    %p49 = scmp.eq.s32.totalorder %s11, 1
    %p50 = scmp.ne.s32.totalorder %s45, %s47
    %p51 = scmp.eq.s32.totalorder %s11, 0
    %p52 = por %p50, %p51
    %p53 = scmp.ne.s32.totalorder %s45, %s47
    %p54 = scmp.eq.s32.totalorder %s16, 1
    %p55 = por %p53, %p54
    %p56 = scmp.ne.s32.totalorder %s47, %s48
    %p57 = scmp.eq.s32.totalorder %s16, 0
    %p58 = por %p56, %p57
    %p59 = scmp.ne.s32.totalorder %s47, %s48
    %p60 = scmp.eq.s32.totalorder %s17, 1
    %p61 = por %p59, %p60
    %p63 = scmp.ne.s32.totalorder %s48, %s62
    %p64 = scmp.eq.s32.totalorder %s17, 0
    %p65 = por %p63, %p64
    %s67 = sadd.s32 %s66, 1
    %p70 = scmp.eq.s32.totalorder %s11, 1
    %p71 = scmp.ne.s32.totalorder %s66, %s68
    %p72 = scmp.eq.s32.totalorder %s11, 0
    %p73 = por %p71, %p72
    %p74 = scmp.ne.s32.totalorder %s66, %s68
    %p75 = scmp.eq.s32.totalorder %s16, 1
    %p76 = por %p74, %p75
    %p77 = scmp.ne.s32.totalorder %s68, %s69
    %p78 = scmp.eq.s32.totalorder %s16, 0
    %p79 = por %p77, %p78
    %p80 = scmp.ne.s32.totalorder %s68, %s69
    %p81 = scmp.eq.s32.totalorder %s17, 1
    %p82 = por %p80, %p81
    %p84 = scmp.ne.s32.totalorder %s69, %s83
    %p85 = scmp.eq.s32.totalorder %s17, 0
    %p86 = por %p84, %p85
    %s88 = sadd.s32 %s87, 1
    %p91 = scmp.eq.s32.totalorder %s11, 1
    %p92 = scmp.ne.s32.totalorder %s87, %s89
    %p93 = scmp.eq.s32.totalorder %s11, 0
    %p94 = por %p92, %p93
    %p95 = scmp.ne.s32.totalorder %s87, %s89
    %p96 = scmp.eq.s32.totalorder %s16, 1
    %p97 = por %p95, %p96
    %p98 = scmp.ne.s32.totalorder %s89, %s90
    %p99 = scmp.eq.s32.totalorder %s16, 0
    %p100 = por %p98, %p99
    %p101 = scmp.ne.s32.totalorder %s89, %s90
    %p102 = scmp.eq.s32.totalorder %s17, 1
    %p103 = por %p101, %p102
    %p105 = scmp.ne.s32.totalorder %s90, %s104
    %p106 = scmp.eq.s32.totalorder %s17, 0
    %p107 = por %p105, %p106
    %s109 = sadd.s32 %s108, 1
    %p112 = scmp.eq.s32.totalorder %s11, 1
    %p113 = scmp.ne.s32.totalorder %s108, %s110
    %p114 = scmp.eq.s32.totalorder %s11, 0
    %p115 = por %p113, %p114
    %p116 = scmp.ne.s32.totalorder %s108, %s110
    %p117 = scmp.eq.s32.totalorder %s16, 1
    %p118 = por %p116, %p117
    %p119 = scmp.ne.s32.totalorder %s110, %s111
    %p120 = scmp.eq.s32.totalorder %s16, 0
    %p121 = por %p119, %p120
    %p122 = scmp.ne.s32.totalorder %s110, %s111
    %p123 = scmp.eq.s32.totalorder %s17, 1
    %p124 = por %p122, %p123
    %p126 = scmp.ne.s32.totalorder %s111, %s125
    %p127 = scmp.eq.s32.totalorder %s17, 0
    %p128 = por %p126, %p127
    %s129 = ssub.s32 %s11, %s18
    %p130 = scmp.eq.s32.totalorder %s129, 0
    %s132 = sadd.s32 %s131, 1
    %s133 = scalar_select %p130, %s131, %s132
    %p136 = pneg %p130
    %p137 = scmp.eq.s32.totalorder %s11, 1
    %p138 = por %p136, %p137
    %p139 = scmp.ne.s32.totalorder %s131, %s134
    %p140 = scmp.eq.s32.totalorder %s11, 0
    %p141 = por %p139, %p140
    %p142 = scmp.ne.s32.totalorder %s131, %s134
    %p143 = scmp.eq.s32.totalorder %s16, 1
    %p144 = por %p142, %p143
    %p145 = scmp.ne.s32.totalorder %s134, %s135
    %p146 = scmp.eq.s32.totalorder %s16, 0
    %p147 = por %p145, %p146
    %p148 = scmp.ne.s32.totalorder %s134, %s135
    %p149 = scmp.eq.s32.totalorder %s17, 1
    %p150 = por %p148, %p149
    %p152 = scmp.ne.s32.totalorder %s135, %s151
    %p153 = scmp.eq.s32.totalorder %s17, 0
    %p154 = por %p152, %p153
    %p155 = scmp.le.s32.totalorder 1, %s11
    %p156 = scmp.lt.s32.totalorder %s11, 3
    %p157 = pnand %p155, %p156
    %p158 = pneg %p157
    // Predicated region
    $region9: #{residual_stack_forward.1} parent=5 // pred_check
      _
    $region10: #{residual_stack_forward.1} parent=5 // pred_check_branch
      %160 = sbr.rel (%p157) target = $region12
    $region11: #{residual_stack_forward.1} parent=5 // pred_region
      %s161 = ssub.s32 %s11, 1
      // Predicated region
      $region13: #{residual_stack_forward.1} parent=11 // pred_check
        %p162 = pneg %p58
      $region14: #{residual_stack_forward.1} parent=11 // pred_check_branch
        %164 = sbr.rel (%p162) target = $region16
      $region15: #{residual_stack_forward.1} parent=11 // pred_region
        _
      $region16: #{residual_stack_forward.1} parent=11 // pred_fallthru
        _
      // Predicated region
      $region17: #{residual_stack_forward.1} parent=11 // pred_check
        %p165 = pneg %p79
      $region18: #{residual_stack_forward.1} parent=11 // pred_check_branch
        %167 = sbr.rel (%p165) target = $region20
      $region19: #{residual_stack_forward.1} parent=11 // pred_region
        _
      $region20: #{residual_stack_forward.1} parent=11 // pred_fallthru
        _
      // Predicated region
      $region21: #{residual_stack_forward.1} parent=11 // pred_check
        %p168 = pneg %p100
      $region22: #{residual_stack_forward.1} parent=11 // pred_check_branch
        %170 = sbr.rel (%p168) target = $region24
      $region23: #{residual_stack_forward.1} parent=11 // pred_region
        _
      $region24: #{residual_stack_forward.1} parent=11 // pred_fallthru
        _
      // Predicated region
      $region25: #{residual_stack_forward.1} parent=11 // pred_check
        %p171 = pneg %p121
      $region26: #{residual_stack_forward.1} parent=11 // pred_check_branch
        %173 = sbr.rel (%p171) target = $region28
      $region27: #{residual_stack_forward.1} parent=11 // pred_region
        _
      $region28: #{residual_stack_forward.1} parent=11 // pred_fallthru
        _
    $region12: #{residual_stack_forward.1} parent=5 // pred_fallthru
      _
    %p174 = scmp.lt.s32.totalorder %s11, 2
    // Predicated region
    $region29: #{residual_stack_forward.1} parent=5 // pred_check
      %p175 = pneg %p174
    $region30: #{residual_stack_forward.1} parent=5 // pred_check_branch
      %177 = sbr.rel (%p175) target = $region32
    $region31: #{residual_stack_forward.1} parent=5 // pred_region
      // Predicated region
      $region33: #{residual_stack_forward.1} parent=31 // pred_check
        %p178 = pneg %p31
      $region34: #{residual_stack_forward.1} parent=31 // pred_check_branch
        %180 = sbr.rel (%p178) target = $region36
      $region35: #{residual_stack_forward.1} parent=31 // pred_region
        %p181 = scmp.lt.s32.totalorder %s11, 1
        %s182 = scalar_select %p181, %s11, 1
        %s183 = smul.addr %s182, 3
        %s184 = smul.addr %s183, 8
        %s185 = scalar_lea.vmem %s0, %s184
      $region36: #{residual_stack_forward.1} parent=31 // pred_fallthru
        _
    $region32: #{residual_stack_forward.1} parent=5 // pred_fallthru
      _
    %p186 = scmp.le.s32.totalorder 1, %s11
    %p187 = scmp.lt.s32.totalorder %s11, 3
    %p188 = pnand %p186, %p187
    %p189 = pneg %p188
    // Predicated region
    $region37: #{residual_stack_forward.1} parent=5 // pred_check
      _
    $region38: #{residual_stack_forward.1} parent=5 // pred_check_branch
      %191 = sbr.rel (%p188) target = $region40
    $region39: #{residual_stack_forward.1} parent=5 // pred_region
      %s192 = ssub.s32 %s11, 1
      %p193 = scmp.lt.s32.totalorder %s16, 1
      %s194 = scalar_select %p193, %s16, 1
      %s195 = smul.addr %s194, 3
      %s196 = smul.addr %s195, 8
      %s197 = scalar_lea.vmem %s0, %s196
      %p198 = pneg %p37
      %p199 = pneg %p34
      %p200 = pneg %p58
      %p201 = pneg %p55
      %p202 = pneg %p79
      %p203 = pneg %p76
      %p204 = pneg %p100
      %p205 = pneg %p97
      %p206 = pneg %p121
      %p207 = pneg %p118
      %p208 = pneg %p147
      %p209 = pneg %p144
      %s210 = smul.u32 2, %s16
      %p211 = scmp.lt.s32.totalorder %s210, 3
      %s212 = scalar_select %p211, %s210, 3
      %s213 = smul.addr %s212, 8
      %s214 = scalar_lea.vmem %s5, %s213
      %p215 = scmp.lt.s32.totalorder %s16, 1
      %s216 = scalar_select %p215, %s16, 1
      %s217 = smul.addr %s216, 3
      %s218 = smul.addr %s217, 8
      %s219 = scalar_lea.vmem %s0, %s218
      %s220 = smul.u32 2, %s16
      %p221 = scmp.lt.s32.totalorder %s220, 3
      %s222 = scalar_select %p221, %s220, 3
      %s223 = smul.addr %s222, 8
      %s224 = scalar_lea.vmem %s5, %s223
      %s225 = smul.u32 2, %s16
      %v226 = vld [vmem:[%s219] sm:$0xff]
      %v227 = vld [vmem:[%s219 + $0x8] sm:$0xff]
      %v228 = vld [vmem:[%s219 + $0x10] sm:$0x3]
      %v229 = vld [vmem:[%s1] sm:$0xff]
      %v230 = vld [vmem:[%s1 + $0x8] sm:$0xff]
      %v231 = vld [vmem:[%s1 + $0x10] sm:$0xff]
      %v232 = vld [vmem:[%s1 + $0x18] sm:$0xff]
      %v233 = vld [vmem:[%s1 + $0x20] sm:$0xff]
      %v234 = vld [vmem:[%s1 + $0x28] sm:$0xff]
      %v235 = vld [vmem:[%s1 + $0x30] sm:$0xff]
      %v236 = vld [vmem:[%s1 + $0x38] sm:$0xff]
      %v237 = vld [vmem:[%s1 + $0x40] sm:$0xff]
      %v238 = vld [vmem:[%s1 + $0x48] sm:$0xff]
      %v239 = vld [vmem:[%s1 + $0x50] sm:$0xff]
      %v240 = vld [vmem:[%s1 + $0x58] sm:$0xff]
      %v241 = vld [vmem:[%s1 + $0x60] sm:$0xff]
      %v242 = vld [vmem:[%s1 + $0x68] sm:$0xff]
      %v243 = vld [vmem:[%s1 + $0x70] sm:$0xff]
      %v244 = vld [vmem:[%s1 + $0x78] sm:$0xff]
      %v245 = vld [vmem:[%s1 + $0x80] sm:$0xff]
      %v246 = vld [vmem:[%s1 + $0x88] sm:$0xff]
      %v247 = vld [vmem:[%s1 + $0x90] sm:$0xff]
      %v248 = vld [vmem:[%s1 + $0x98] sm:$0xff]
      %v249 = vld [vmem:[%s1 + $0xa0] sm:$0xff]
      %v250 = vld [vmem:[%s1 + $0xa8] sm:$0xff]
      %v251 = vld [vmem:[%s1 + $0xb0] sm:$0xff]
      %v252 = vld [vmem:[%s1 + $0xb8] sm:$0xff]
      %v253 = vld [vmem:[%s1 + $0xc0] sm:$0xff]
      %v254 = vld [vmem:[%s1 + $0xc8] sm:$0xff]
      %v255 = vld [vmem:[%s1 + $0xd0] sm:$0xff]
      %v256 = vld [vmem:[%s1 + $0xd8] sm:$0xff]
      %v257 = vld [vmem:[%s1 + $0xe0] sm:$0xff]
      %v258 = vld [vmem:[%s1 + $0xe8] sm:$0xff]
      %v259 = vld [vmem:[%s1 + $0xf0] sm:$0xff]
      %v260 = vld [vmem:[%s1 + $0xf8] sm:$0xff]
      %v261 = vld [vmem:[%s1 + $0x100] sm:$0xff]
      %v262 = vld [vmem:[%s1 + $0x108] sm:$0xff]
      %v263 = vld [vmem:[%s1 + $0x110] sm:$0xff]
      %v264 = vld [vmem:[%s1 + $0x118] sm:$0xff]
      %v265 = vld [vmem:[%s1 + $0x120] sm:$0xff]
      %v266 = vld [vmem:[%s1 + $0x128] sm:$0xff]
      %v267 = vld [vmem:[%s1 + $0x130] sm:$0xff]
      %v268 = vld [vmem:[%s1 + $0x138] sm:$0xff]
      %v269 = vld [vmem:[%s1 + $0x140] sm:$0xff]
      %v270 = vld [vmem:[%s1 + $0x148] sm:$0xff]
      %v271 = vld [vmem:[%s1 + $0x150] sm:$0xff]
      %v272 = vld [vmem:[%s1 + $0x158] sm:$0xff]
      %v273 = vld [vmem:[%s1 + $0x160] sm:$0xff]
      %v274 = vld [vmem:[%s1 + $0x168] sm:$0xff]
      %v275 = vld [vmem:[%s1 + $0x170] sm:$0xff]
      %v276 = vld [vmem:[%s1 + $0x178] sm:$0xff]
      %v277 = vld [vmem:[%s1 + $0x180] sm:$0xff]
      %v278 = vld [vmem:[%s1 + $0x188] sm:$0xff]
      %v279 = vld [vmem:[%s1 + $0x190] sm:$0xff]
      %v280 = vld [vmem:[%s1 + $0x198] sm:$0xff]
      %v281 = vld [vmem:[%s1 + $0x1a0] sm:$0xff]
      %v282 = vld [vmem:[%s1 + $0x1a8] sm:$0xff]
      %v283 = vld [vmem:[%s1 + $0x1b0] sm:$0xff]
      %v284 = vld [vmem:[%s1 + $0x1b8] sm:$0xff]
      %v285 = vld [vmem:[%s1 + $0x1c0] sm:$0xff]
      %v286 = vld [vmem:[%s1 + $0x1c8] sm:$0xff]
      %v287 = vld [vmem:[%s1 + $0x1d0] sm:$0xff]
      %v288 = vld [vmem:[%s1 + $0x1d8] sm:$0xff]
      %v289 = vld [vmem:[%s1 + $0x1e0] sm:$0xff]
      %v290 = vld [vmem:[%s1 + $0x1e8] sm:$0xff]
      %v291 = vld [vmem:[%s1 + $0x1f0] sm:$0xff]
      %v292 = vld [vmem:[%s1 + $0x1f8] sm:$0xff]
      %v293 = vld [vmem:[%s1 + $0x200] sm:$0xff]
      %v294 = vld [vmem:[%s1 + $0x208] sm:$0xff]
      %v295 = vld [vmem:[%s1 + $0x210] sm:$0xff]
      %v296 = vld [vmem:[%s1 + $0x218] sm:$0xff]
      %v297 = vld [vmem:[%s1 + $0x220] sm:$0xff]
      %v298 = vld [vmem:[%s1 + $0x228] sm:$0xff]
      %v299 = vld [vmem:[%s1 + $0x230] sm:$0xff]
      %v300 = vld [vmem:[%s1 + $0x238] sm:$0xff]
      %v301 = vld [vmem:[%s2] sm:$0xff]
      %v302 = vld [vmem:[%s2 + $0x8] sm:$0xff]
      %v303 = vld [vmem:[%s2 + $0x10] sm:$0xff]
      %v304 = vld [vmem:[%s2 + $0x18] sm:$0xff]
      %v305 = vld [vmem:[%s2 + $0x20] sm:$0xff]
      %v306 = vld [vmem:[%s2 + $0x28] sm:$0xff]
      %v307 = vld [vmem:[%s2 + $0x30] sm:$0xff]
      %v308 = vld [vmem:[%s2 + $0x38] sm:$0xff]
      %v309 = vld [vmem:[%s2 + $0x40] sm:$0xff]
      %v310 = vld [vmem:[%s2 + $0x48] sm:$0xff]
      %v311 = vld [vmem:[%s2 + $0x50] sm:$0xff]
      %v312 = vld [vmem:[%s2 + $0x58] sm:$0xff]
      %v313 = vld [vmem:[%s2 + $0x60] sm:$0xff]
      %v314 = vld [vmem:[%s2 + $0x68] sm:$0xff]
      %v315 = vld [vmem:[%s2 + $0x70] sm:$0xff]
      %v316 = vld [vmem:[%s2 + $0x78] sm:$0xff]
      %v317 = vld [vmem:[%s2 + $0x80] sm:$0xff]
      %v318 = vld [vmem:[%s2 + $0x88] sm:$0xff]
      %v319 = vld [vmem:[%s2 + $0x90] sm:$0xff]
      %v320 = vld [vmem:[%s2 + $0x98] sm:$0xff]
      %v321 = vld [vmem:[%s2 + $0xa0] sm:$0xff]
      %v322 = vld [vmem:[%s2 + $0xa8] sm:$0xff]
      %v323 = vld [vmem:[%s2 + $0xb0] sm:$0xff]
      %v324 = vld [vmem:[%s2 + $0xb8] sm:$0xff]
      %v325 = vld [vmem:[%s2 + $0xc0] sm:$0xff]
      %v326 = vld [vmem:[%s2 + $0xc8] sm:$0xff]
      %v327 = vld [vmem:[%s2 + $0xd0] sm:$0xff]
      %v328 = vld [vmem:[%s2 + $0xd8] sm:$0xff]
      %v329 = vld [vmem:[%s2 + $0xe0] sm:$0xff]
      %v330 = vld [vmem:[%s2 + $0xe8] sm:$0xff]
      %v331 = vld [vmem:[%s2 + $0xf0] sm:$0xff]
      %v332 = vld [vmem:[%s2 + $0xf8] sm:$0xff]
      %v333 = vld [vmem:[%s2 + $0x100] sm:$0xff]
      %v334 = vld [vmem:[%s2 + $0x108] sm:$0xff]
      %v335 = vld [vmem:[%s2 + $0x110] sm:$0xff]
      %v336 = vld [vmem:[%s2 + $0x118] sm:$0xff]
      %v337 = vld [vmem:[%s2 + $0x120] sm:$0xff]
      %v338 = vld [vmem:[%s2 + $0x128] sm:$0xff]
      %v339 = vld [vmem:[%s2 + $0x130] sm:$0xff]
      %v340 = vld [vmem:[%s2 + $0x138] sm:$0xff]
      %v341 = vld [vmem:[%s2 + $0x140] sm:$0xff]
      %v342 = vld [vmem:[%s2 + $0x148] sm:$0xff]
      %v343 = vld [vmem:[%s2 + $0x150] sm:$0xff]
      %v344 = vld [vmem:[%s2 + $0x158] sm:$0xff]
      %v345 = vld [vmem:[%s2 + $0x160] sm:$0xff]
      %v346 = vld [vmem:[%s2 + $0x168] sm:$0xff]
      %v347 = vld [vmem:[%s2 + $0x170] sm:$0xff]
      %v348 = vld [vmem:[%s2 + $0x178] sm:$0xff]
      %v349 = vld [vmem:[%s2 + $0x180] sm:$0xff]
      %v350 = vld [vmem:[%s2 + $0x188] sm:$0xff]
      %v351 = vld [vmem:[%s2 + $0x190] sm:$0xff]
      %v352 = vld [vmem:[%s2 + $0x198] sm:$0xff]
      %v353 = vld [vmem:[%s2 + $0x1a0] sm:$0xff]
      %v354 = vld [vmem:[%s2 + $0x1a8] sm:$0xff]
      %v355 = vld [vmem:[%s2 + $0x1b0] sm:$0xff]
      %v356 = vld [vmem:[%s2 + $0x1b8] sm:$0xff]
      %v357 = vld [vmem:[%s2 + $0x1c0] sm:$0xff]
      %v358 = vld [vmem:[%s2 + $0x1c8] sm:$0xff]
      %v359 = vld [vmem:[%s2 + $0x1d0] sm:$0xff]
      %v360 = vld [vmem:[%s2 + $0x1d8] sm:$0xff]
      %v361 = vld [vmem:[%s2 + $0x1e0] sm:$0xff]
      %v362 = vld [vmem:[%s2 + $0x1e8] sm:$0xff]
      %v363 = vld [vmem:[%s2 + $0x1f0] sm:$0xff]
      %v364 = vld [vmem:[%s2 + $0x1f8] sm:$0xff]
      %v365 = vld [vmem:[%s2 + $0x200] sm:$0xff]
      %v366 = vld [vmem:[%s2 + $0x208] sm:$0xff]
      %v367 = vld [vmem:[%s2 + $0x210] sm:$0xff]
      %v368 = vld [vmem:[%s2 + $0x218] sm:$0xff]
      %v369 = vld [vmem:[%s2 + $0x220] sm:$0xff]
      %v370 = vld [vmem:[%s2 + $0x228] sm:$0xff]
      %v371 = vld [vmem:[%s2 + $0x230] sm:$0xff]
      %v372 = vld [vmem:[%s2 + $0x238] sm:$0xff]
      %v373 = vld [vmem:[%s2 + $0x240] sm:$0xff]
      %v374 = vld [vmem:[%s2 + $0x248] sm:$0xff]
      %v375 = vld [vmem:[%s2 + $0x250] sm:$0xff]
      %v376 = vld [vmem:[%s2 + $0x258] sm:$0xff]
      %v377 = vld [vmem:[%s2 + $0x260] sm:$0xff]
      %v378 = vld [vmem:[%s2 + $0x268] sm:$0xff]
      %v379 = vld [vmem:[%s2 + $0x270] sm:$0xff]
      %v380 = vld [vmem:[%s2 + $0x278] sm:$0xff]
      %v381 = vld [vmem:[%s2 + $0x280] sm:$0xff]
      %v382 = vld [vmem:[%s2 + $0x288] sm:$0xff]
      %v383 = vld [vmem:[%s2 + $0x290] sm:$0xff]
      %v384 = vld [vmem:[%s2 + $0x298] sm:$0xff]
      %v385 = vld [vmem:[%s2 + $0x2a0] sm:$0xff]
      %v386 = vld [vmem:[%s2 + $0x2a8] sm:$0xff]
      %v387 = vld [vmem:[%s2 + $0x2b0] sm:$0xff]
      %v388 = vld [vmem:[%s2 + $0x2b8] sm:$0xff]
      %v389 = vld [vmem:[%s2 + $0x2c0] sm:$0xff]
      %v390 = vld [vmem:[%s2 + $0x2c8] sm:$0xff]
      %v391 = vld [vmem:[%s2 + $0x2d0] sm:$0xff]
      %v392 = vld [vmem:[%s2 + $0x2d8] sm:$0xff]
      %v393 = vld [vmem:[%s2 + $0x2e0] sm:$0xff]
      %v394 = vld [vmem:[%s2 + $0x2e8] sm:$0xff]
      %v395 = vld [vmem:[%s2 + $0x2f0] sm:$0xff]
      %v396 = vld [vmem:[%s2 + $0x2f8] sm:$0xff]
      %v397 = vld [vmem:[%s2 + $0x300] sm:$0xff]
      %v398 = vld [vmem:[%s2 + $0x308] sm:$0xff]
      %v399 = vld [vmem:[%s2 + $0x310] sm:$0xff]
      %v400 = vld [vmem:[%s2 + $0x318] sm:$0xff]
      %v401 = vld [vmem:[%s2 + $0x320] sm:$0xff]
      %v402 = vld [vmem:[%s2 + $0x328] sm:$0xff]
      %v403 = vld [vmem:[%s2 + $0x330] sm:$0xff]
      %v404 = vld [vmem:[%s2 + $0x338] sm:$0xff]
      %v405 = vld [vmem:[%s2 + $0x340] sm:$0xff]
      %v406 = vld [vmem:[%s2 + $0x348] sm:$0xff]
      %v407 = vld [vmem:[%s2 + $0x350] sm:$0xff]
      %v408 = vld [vmem:[%s2 + $0x358] sm:$0xff]
      %v409 = vld [vmem:[%s2 + $0x360] sm:$0xff]
      %v410 = vld [vmem:[%s2 + $0x368] sm:$0xff]
      %v411 = vld [vmem:[%s2 + $0x370] sm:$0xff]
      %v412 = vld [vmem:[%s2 + $0x378] sm:$0xff]
      %v413 = vld [vmem:[%s2 + $0x380] sm:$0xff]
      %v414 = vld [vmem:[%s2 + $0x388] sm:$0xff]
      %v415 = vld [vmem:[%s2 + $0x390] sm:$0xff]
      %v416 = vld [vmem:[%s2 + $0x398] sm:$0xff]
      %v417 = vld [vmem:[%s2 + $0x3a0] sm:$0xff]
      %v418 = vld [vmem:[%s2 + $0x3a8] sm:$0xff]
      %v419 = vld [vmem:[%s2 + $0x3b0] sm:$0xff]
      %v420 = vld [vmem:[%s2 + $0x3b8] sm:$0xff]
      %v421 = vld [vmem:[%s2 + $0x3c0] sm:$0xff]
      %v422 = vld [vmem:[%s2 + $0x3c8] sm:$0xff]
      %v423 = vld [vmem:[%s2 + $0x3d0] sm:$0xff]
      %v424 = vld [vmem:[%s2 + $0x3d8] sm:$0xff]
      %v425 = vld [vmem:[%s2 + $0x3e0] sm:$0xff]
      %v426 = vld [vmem:[%s2 + $0x3e8] sm:$0xff]
      %v427 = vld [vmem:[%s2 + $0x3f0] sm:$0xff]
      %v428 = vld [vmem:[%s2 + $0x3f8] sm:$0xff]
      %v429 = vld [vmem:[%s2 + $0x400] sm:$0xff]
      %v430 = vld [vmem:[%s2 + $0x408] sm:$0xff]
      %v431 = vld [vmem:[%s2 + $0x410] sm:$0xff]
      %v432 = vld [vmem:[%s2 + $0x418] sm:$0xff]
      %v433 = vld [vmem:[%s2 + $0x420] sm:$0xff]
      %v434 = vld [vmem:[%s2 + $0x428] sm:$0xff]
      %v435 = vld [vmem:[%s2 + $0x430] sm:$0xff]
      %v436 = vld [vmem:[%s2 + $0x438] sm:$0xff]
      %v437 = vld [vmem:[%s2 + $0x440] sm:$0xff]
      %v438 = vld [vmem:[%s2 + $0x448] sm:$0xff]
      %v439 = vld [vmem:[%s2 + $0x450] sm:$0xff]
      %v440 = vld [vmem:[%s2 + $0x458] sm:$0xff]
      %v441 = vld [vmem:[%s2 + $0x460] sm:$0xff]
      %v442 = vld [vmem:[%s2 + $0x468] sm:$0xff]
      %v443 = vld [vmem:[%s2 + $0x470] sm:$0xff]
      %v444 = vld [vmem:[%s2 + $0x478] sm:$0xff]
      %v445 = vld [vmem:[%s2 + $0x480] sm:$0xff]
      %v446 = vld [vmem:[%s2 + $0x488] sm:$0xff]
      %v447 = vld [vmem:[%s2 + $0x490] sm:$0xff]
      %v448 = vld [vmem:[%s2 + $0x498] sm:$0xff]
      %v449 = vld [vmem:[%s2 + $0x4a0] sm:$0xff]
      %v450 = vld [vmem:[%s2 + $0x4a8] sm:$0xff]
      %v451 = vld [vmem:[%s2 + $0x4b0] sm:$0xff]
      %v452 = vld [vmem:[%s2 + $0x4b8] sm:$0xff]
      %455 = vrot.lane.b32.xlu0 %v226, 60
      %v456 = vpop.permute.xlu0 %455
      %457 = vrot.lane.b32.xlu0 %v227, 60
      %v458 = vpop.permute.xlu0 %457
      %461 = vrot.lane.b32.xlu0 %v226, 120
      %v462 = vpop.permute.xlu0 %461
      %463 = vrot.lane.b32.xlu0 %v227, 120
      %v464 = vpop.permute.xlu0 %463
      %vm468 = vcmask 1046528
      %v469 = vrot.slane %v226, 1
      %v470 = vrot.slane %v227, 1
      %v471 = vsel %vm468, %v469, %v470
      %v472 = vrot.slane %v228, 1
      %v473 = vsel %vm468, %v470, %v472
      %474 = vrot.lane.b32.xlu0 %v471, 64
      %v475 = vpop.permute.xlu0 %474
      %476 = vrot.lane.b32.xlu0 %v473, 64
      %v477 = vpop.permute.xlu0 %476
      %480 = vrot.lane.b32.xlu0 %v471, 124
      %v481 = vpop.permute.xlu0 %480
      %482 = vrot.lane.b32.xlu0 %v473, 124
      %v483 = vpop.permute.xlu0 %482
      %486 = vrot.lane.b32.xlu0 %v471, 56
      %v487 = vpop.permute.xlu0 %486
      %488 = vrot.lane.b32.xlu0 %v473, 56
      %v489 = vpop.permute.xlu0 %488
      %vm492 = vcmask 1045504
      %v493 = vrot.slane %v226, 2
      %v494 = vrot.slane %v227, 2
      %v495 = vsel %vm492, %v493, %v494
      %v496 = vrot.slane %v228, 2
      %v497 = vsel %vm492, %v494, %v496
      %500 = vrot.lane.b32.xlu0 %v495, 60
      %v501 = vpop.permute.xlu0 %500
      %502 = vrot.lane.b32.xlu0 %v497, 60
      %v503 = vpop.permute.xlu0 %502
      %506 = vrot.lane.b32.xlu0 %v495, 120
      %v507 = vpop.permute.xlu0 %506
      %508 = vrot.lane.b32.xlu0 %v497, 120
      %v509 = vpop.permute.xlu0 %508
      %vm510 = vcmask 523264
      %v511 = vsel %vm510, %v226, %v456
      %v512 = vsel %vm510, %v227, %v458
      %v513 = vsel %vm510, %v462, %v475
      %v514 = vsel %vm510, %v464, %v477
      %v515 = vsel %vm510, %v481, %v487
      %v516 = vsel %vm510, %v483, %v489
      %v517 = vsel %vm510, %v495, %v501
      %v518 = vsel %vm510, %v497, %v503
      %v519 = vsel %vm510, %v507, 0
      %v521 = vsel %vm510, %v509, 0
      %523 = vmatprep.subr.mxu0 0.0
      %524 = vmatpush1.msra.mxu0 %v244
      %525 = vmatprep.subr.mxu0 0.0
      %526 = vmatpush1.msra.mxu0 %v243
      %527 = vmatprep.subr.mxu0 0.0
      %528 = vmatpush1.msra.mxu0 %v242
      %529 = vmatprep.subr.mxu0 0.0
      %530 = vmatpush1.msra.mxu0 %v241
      %531 = vmatprep.subr.mxu0 0.0
      %532 = vmatpush1.msra.mxu0 %v240
      %533 = vmatprep.subr.mxu0 0.0
      %534 = vmatpush1.msra.mxu0 %v239
      %535 = vmatprep.subr.mxu0 0.0
      %536 = vmatpush1.msra.mxu0 %v238
      %537 = vmatprep.subr.mxu0 0.0
      %538 = vmatpush1.msra.mxu0 %v237
      %539 = vmatprep.subr.mxu0 0.0
      %540 = vmatpush1.msra.mxu0 %v236
      %541 = vmatprep.subr.mxu0 0.0
      %542 = vmatpush1.msra.mxu0 %v235
      %543 = vmatprep.subr.mxu0 0.0
      %544 = vmatpush1.msra.mxu0 %v234
      %545 = vmatprep.subr.mxu0 0.0
      %546 = vmatpush1.msra.mxu0 %v233
      %547 = vmatprep.subr.mxu0 0.0
      %548 = vmatpush1.msra.mxu0 %v232
      %549 = vmatprep.subr.mxu0 0.0
      %550 = vmatpush1.msra.mxu0 %v231
      %551 = vmatprep.subr.mxu0 0.0
      %552 = vmatpush1.msra.mxu0 %v230
      %553 = vmatprep.subr.mxu0 0.0
      %554 = vmatpush1.msra.mxu0 %v229
      %555 = vmatprep.subr.mxu0 0.0
      %556 = vmatpush2.msra.mxu0 %v260
      %557 = vmatprep.subr.mxu0 0.0
      %558 = vmatpush2.msra.mxu0 %v259
      %559 = vmatprep.subr.mxu0 0.0
      %560 = vmatpush2.msra.mxu0 %v258
      %561 = vmatprep.subr.mxu0 0.0
      %562 = vmatpush2.msra.mxu0 %v257
      %563 = vmatprep.subr.mxu0 0.0
      %564 = vmatpush2.msra.mxu0 %v256
      %565 = vmatprep.subr.mxu0 0.0
      %566 = vmatpush2.msra.mxu0 %v255
      %567 = vmatprep.subr.mxu0 0.0
      %568 = vmatpush2.msra.mxu0 %v254
      %569 = vmatprep.subr.mxu0 0.0
      %570 = vmatpush2.msra.mxu0 %v253
      %571 = vmatprep.subr.mxu0 0.0
      %572 = vmatpush2.msra.mxu0 %v252
      %573 = vmatprep.subr.mxu0 0.0
      %574 = vmatpush2.msra.mxu0 %v251
      %575 = vmatprep.subr.mxu0 0.0
      %576 = vmatpush2.msra.mxu0 %v250
      %577 = vmatprep.subr.mxu0 0.0
      %578 = vmatpush2.msra.mxu0 %v249
      %579 = vmatprep.subr.mxu0 0.0
      %580 = vmatpush2.msra.mxu0 %v248
      %581 = vmatprep.subr.mxu0 0.0
      %582 = vmatpush2.msra.mxu0 %v247
      %583 = vmatprep.subr.mxu0 0.0
      %584 = vmatpush2.msra.mxu0 %v246
      %585 = vmatprep.subr.mxu0 0.0
      %586 = vmatpush2.msra.mxu0 %v245
      %587 = vmatprep.mubr.f32.mxu0 %v513
      %588 = vmatmul.mubr.f32.gmra.mxu0 %v511
      %v589 = vpop.f32.mrf.mxu0
      %v590 = vadd.f32 0.0, %v589
      %v591 = vpop.f32.mrf.mxu0
      %592 = vmatprep.mubr.f32.mxu0 %v514
      %593 = vmatmul.mubr.f32.gmra.mxu0 %v512
      %v594 = vpop.f32.mrf.mxu0
      %v595 = vadd.f32 0.0, %v594
      %v596 = vpop.f32.mrf.mxu0
      %597 = vdwg.mxu0
      %598 = vmatprep.subr.mxu0 0.0
      %599 = vmatpush1.msra.mxu0 %v276
      %600 = vmatprep.subr.mxu0 0.0
      %601 = vmatpush1.msra.mxu0 %v275
      %602 = vmatprep.subr.mxu0 0.0
      %603 = vmatpush1.msra.mxu0 %v274
      %604 = vmatprep.subr.mxu0 0.0
      %605 = vmatpush1.msra.mxu0 %v273
      %606 = vmatprep.subr.mxu0 0.0
      %607 = vmatpush1.msra.mxu0 %v272
      %608 = vmatprep.subr.mxu0 0.0
      %609 = vmatpush1.msra.mxu0 %v271
      %610 = vmatprep.subr.mxu0 0.0
      %611 = vmatpush1.msra.mxu0 %v270
      %612 = vmatprep.subr.mxu0 0.0
      %613 = vmatpush1.msra.mxu0 %v269
      %614 = vmatprep.subr.mxu0 0.0
      %615 = vmatpush1.msra.mxu0 %v268
      %616 = vmatprep.subr.mxu0 0.0
      %617 = vmatpush1.msra.mxu0 %v267
      %618 = vmatprep.subr.mxu0 0.0
      %619 = vmatpush1.msra.mxu0 %v266
      %620 = vmatprep.subr.mxu0 0.0
      %621 = vmatpush1.msra.mxu0 %v265
      %622 = vmatprep.subr.mxu0 0.0
      %623 = vmatpush1.msra.mxu0 %v264
      %624 = vmatprep.subr.mxu0 0.0
      %625 = vmatpush1.msra.mxu0 %v263
      %626 = vmatprep.subr.mxu0 0.0
      %627 = vmatpush1.msra.mxu0 %v262
      %628 = vmatprep.subr.mxu0 0.0
      %629 = vmatpush1.msra.mxu0 %v261
      %630 = vmatprep.subr.mxu0 0.0
      %631 = vmatpush2.msra.mxu0 %v292
      %632 = vmatprep.subr.mxu0 0.0
      %633 = vmatpush2.msra.mxu0 %v291
      %634 = vmatprep.subr.mxu0 0.0
      %635 = vmatpush2.msra.mxu0 %v290
      %636 = vmatprep.subr.mxu0 0.0
      %637 = vmatpush2.msra.mxu0 %v289
      %638 = vmatprep.subr.mxu0 0.0
      %639 = vmatpush2.msra.mxu0 %v288
      %640 = vmatprep.subr.mxu0 0.0
      %641 = vmatpush2.msra.mxu0 %v287
      %642 = vmatprep.subr.mxu0 0.0
      %643 = vmatpush2.msra.mxu0 %v286
      %644 = vmatprep.subr.mxu0 0.0
      %645 = vmatpush2.msra.mxu0 %v285
      %646 = vmatprep.subr.mxu0 0.0
      %647 = vmatpush2.msra.mxu0 %v284
      %648 = vmatprep.subr.mxu0 0.0
      %649 = vmatpush2.msra.mxu0 %v283
      %650 = vmatprep.subr.mxu0 0.0
      %651 = vmatpush2.msra.mxu0 %v282
      %652 = vmatprep.subr.mxu0 0.0
      %653 = vmatpush2.msra.mxu0 %v281
      %654 = vmatprep.subr.mxu0 0.0
      %655 = vmatpush2.msra.mxu0 %v280
      %656 = vmatprep.subr.mxu0 0.0
      %657 = vmatpush2.msra.mxu0 %v279
      %658 = vmatprep.subr.mxu0 0.0
      %659 = vmatpush2.msra.mxu0 %v278
      %660 = vmatprep.subr.mxu0 0.0
      %661 = vmatpush2.msra.mxu0 %v277
      %662 = vmatprep.mubr.f32.mxu0 %v517
      %663 = vmatmul.mubr.f32.gmra.mxu0 %v515
      %v664 = vpop.f32.mrf.mxu0
      %v665 = vadd.f32 %v590, %v664
      %v666 = vpop.f32.mrf.mxu0
      %667 = vmatprep.mubr.f32.mxu0 %v518
      %668 = vmatmul.mubr.f32.gmra.mxu0 %v516
      %v669 = vpop.f32.mrf.mxu0
      %v670 = vadd.f32 %v595, %v669
      %v671 = vpop.f32.mrf.mxu0
      %672 = vdwg.mxu0
      %673 = vmatprep.subr.mxu0 0.0
      %674 = vmatpush1.msra.mxu0 0.0
      %675 = vmatprep.subr.mxu0 0.0
      %676 = vmatpush1.msra.mxu0 0.0
      %677 = vmatprep.subr.mxu0 0.0
      %678 = vmatpush1.msra.mxu0 0.0
      %679 = vmatprep.subr.mxu0 0.0
      %680 = vmatpush1.msra.mxu0 0.0
      %681 = vmatprep.subr.mxu0 0.0
      %682 = vmatpush1.msra.mxu0 0.0
      %683 = vmatprep.subr.mxu0 0.0
      %684 = vmatpush1.msra.mxu0 0.0
      %685 = vmatprep.subr.mxu0 0.0
      %686 = vmatpush1.msra.mxu0 0.0
      %687 = vmatprep.subr.mxu0 0.0
      %688 = vmatpush1.msra.mxu0 0.0
      %689 = vmatprep.subr.mxu0 0.0
      %690 = vmatpush1.msra.mxu0 %v300
      %691 = vmatprep.subr.mxu0 0.0
      %692 = vmatpush1.msra.mxu0 %v299
      %693 = vmatprep.subr.mxu0 0.0
      %694 = vmatpush1.msra.mxu0 %v298
      %695 = vmatprep.subr.mxu0 0.0
      %696 = vmatpush1.msra.mxu0 %v297
      %697 = vmatprep.subr.mxu0 0.0
      %698 = vmatpush1.msra.mxu0 %v296
      %699 = vmatprep.subr.mxu0 0.0
      %700 = vmatpush1.msra.mxu0 %v295
      %701 = vmatprep.subr.mxu0 0.0
      %702 = vmatpush1.msra.mxu0 %v294
      %703 = vmatprep.subr.mxu0 0.0
      %704 = vmatpush1.msra.mxu0 %v293
      %705 = vmatprep.subr.mxu0 0.0
      %706 = vmatpush2.msra.mxu0 0.0
      %707 = vmatprep.subr.mxu0 0.0
      %708 = vmatpush2.msra.mxu0 0.0
      %709 = vmatprep.subr.mxu0 0.0
      %710 = vmatpush2.msra.mxu0 0.0
      %711 = vmatprep.subr.mxu0 0.0
      %712 = vmatpush2.msra.mxu0 0.0
      %713 = vmatprep.subr.mxu0 0.0
      %714 = vmatpush2.msra.mxu0 0.0
      %715 = vmatprep.subr.mxu0 0.0
      %716 = vmatpush2.msra.mxu0 0.0
      %717 = vmatprep.subr.mxu0 0.0
      %718 = vmatpush2.msra.mxu0 0.0
      %719 = vmatprep.subr.mxu0 0.0
      %720 = vmatpush2.msra.mxu0 0.0
      %721 = vmatprep.subr.mxu0 0.0
      %722 = vmatpush2.msra.mxu0 0.0
      %723 = vmatprep.subr.mxu0 0.0
      %724 = vmatpush2.msra.mxu0 0.0
      %725 = vmatprep.subr.mxu0 0.0
      %726 = vmatpush2.msra.mxu0 0.0
      %727 = vmatprep.subr.mxu0 0.0
      %728 = vmatpush2.msra.mxu0 0.0
      %729 = vmatprep.subr.mxu0 0.0
      %730 = vmatpush2.msra.mxu0 0.0
      %731 = vmatprep.subr.mxu0 0.0
      %732 = vmatpush2.msra.mxu0 0.0
      %733 = vmatprep.subr.mxu0 0.0
      %734 = vmatpush2.msra.mxu0 0.0
      %735 = vmatprep.subr.mxu0 0.0
      %736 = vmatpush2.msra.mxu0 0.0
      %737 = vmatprep.mubr.f32.mxu0 0.0
      %738 = vmatmul.mubr.f32.gmra.mxu0 %v519
      %v739 = vpop.f32.mrf.mxu0
      %v740 = vadd.f32 %v665, %v739
      %v741 = vpop.f32.mrf.mxu0
      %742 = vmatprep.mubr.f32.mxu0 0.0
      %743 = vmatmul.mubr.f32.gmra.mxu0 %v521
      %v744 = vpop.f32.mrf.mxu0
      %v745 = vadd.f32 %v670, %v744
      %v746 = vpop.f32.mrf.mxu0
      %747 = vdwg.mxu0
      %v748 = vmax.f32 %v740, 0.0
      %v749 = vmax.f32 %v745, 0.0
      %752 = vrot.lane.b32.xlu0 %v748, 8
      %v753 = vpop.permute.xlu0 %752
      %754 = vrot.lane.b32.xlu0 %v749, 8
      %v755 = vpop.permute.xlu0 %754
      %vm758 = vcmask 64512
      %v759 = vsel %vm758, 0.0, %v753
      %v760 = vsel %vm758, 0.0, %v755
      %v761 = vsel %vm758, %v753, 0.0
      %v762 = vsel %vm758, %v755, 0.0
      %vm767 = vcmask 1040384
      %v768 = vrot.slane %v759, 7
      %v769 = vrot.slane %v761, 7
      %v770 = vrot.slane %v760, 7
      %v771 = vsel %vm767, %v768, %v770
      %v772 = vrot.slane %v762, 7
      %v773 = vsel %vm767, %v769, %v772
      %v779 = vsel %vm767, 0.0, %v768
      %v780 = vsel %vm767, 0.0, %v769
      %v781 = vsel %vm767, %v770, 0.0
      %v782 = vsel %vm767, %v772, 0.0
      %785 = vrot.lane.b32.xlu0 %v779, 120
      %v786 = vpop.permute.xlu0 %785
      %787 = vrot.lane.b32.xlu0 %v780, 120
      %v788 = vpop.permute.xlu0 %787
      %789 = vrot.lane.b32.xlu0 %v771, 120
      %v790 = vpop.permute.xlu0 %789
      %791 = vrot.lane.b32.xlu0 %v773, 120
      %v792 = vpop.permute.xlu0 %791
      %vm793 = vcmask 982016
      %v794 = vsel %vm793, %v786, %v788
      %v795 = vsel %vm793, %v790, %v792
      %798 = vrot.lane.b32.xlu0 %v779, 112
      %v799 = vpop.permute.xlu0 %798
      %800 = vrot.lane.b32.xlu0 %v780, 112
      %v801 = vpop.permute.xlu0 %800
      %802 = vrot.lane.b32.xlu0 %v771, 112
      %v803 = vpop.permute.xlu0 %802
      %804 = vrot.lane.b32.xlu0 %v773, 112
      %v805 = vpop.permute.xlu0 %804
      %vm806 = vcmask 916480
      %v807 = vsel %vm806, %v799, %v801
      %v808 = vsel %vm806, %v803, %v805
      %v812 = vrot.slane %v779, 1
      %v813 = vrot.slane %v771, 1
      %v814 = vsel %vm468, %v812, %v813
      %v815 = vrot.slane %v781, 1
      %v816 = vsel %vm468, %v813, %v815
      %v820 = vrot.slane %v780, 1
      %v821 = vrot.slane %v773, 1
      %v822 = vsel %vm468, %v820, %v821
      %v823 = vrot.slane %v782, 1
      %v824 = vsel %vm468, %v821, %v823
      %825 = vrot.lane.b32.xlu0 %v814, 120
      %v826 = vpop.permute.xlu0 %825
      %827 = vrot.lane.b32.xlu0 %v822, 120
      %v828 = vpop.permute.xlu0 %827
      %829 = vrot.lane.b32.xlu0 %v816, 120
      %v830 = vpop.permute.xlu0 %829
      %831 = vrot.lane.b32.xlu0 %v824, 120
      %v832 = vpop.permute.xlu0 %831
      %v833 = vsel %vm793, %v826, %v828
      %v834 = vsel %vm793, %v830, %v832
      %837 = vrot.lane.b32.xlu0 %v814, 112
      %v838 = vpop.permute.xlu0 %837
      %839 = vrot.lane.b32.xlu0 %v822, 112
      %v840 = vpop.permute.xlu0 %839
      %841 = vrot.lane.b32.xlu0 %v816, 112
      %v842 = vpop.permute.xlu0 %841
      %843 = vrot.lane.b32.xlu0 %v824, 112
      %v844 = vpop.permute.xlu0 %843
      %v845 = vsel %vm806, %v838, %v840
      %v846 = vsel %vm806, %v842, %v844
      %v849 = vrot.slane %v779, 2
      %v850 = vrot.slane %v771, 2
      %v851 = vsel %vm492, %v849, %v850
      %v852 = vrot.slane %v781, 2
      %v853 = vsel %vm492, %v850, %v852
      %v856 = vrot.slane %v780, 2
      %v857 = vrot.slane %v773, 2
      %v858 = vsel %vm492, %v856, %v857
      %v859 = vrot.slane %v782, 2
      %v860 = vsel %vm492, %v857, %v859
      %861 = vrot.lane.b32.xlu0 %v851, 120
      %v862 = vpop.permute.xlu0 %861
      %863 = vrot.lane.b32.xlu0 %v858, 120
      %v864 = vpop.permute.xlu0 %863
      %865 = vrot.lane.b32.xlu0 %v853, 120
      %v866 = vpop.permute.xlu0 %865
      %867 = vrot.lane.b32.xlu0 %v860, 120
      %v868 = vpop.permute.xlu0 %867
      %v869 = vsel %vm793, %v862, %v864
      %v870 = vsel %vm793, %v866, %v868
      %873 = vrot.lane.b32.xlu0 %v851, 112
      %v874 = vpop.permute.xlu0 %873
      %875 = vrot.lane.b32.xlu0 %v858, 112
      %v876 = vpop.permute.xlu0 %875
      %877 = vrot.lane.b32.xlu0 %v853, 112
      %v878 = vpop.permute.xlu0 %877
      %879 = vrot.lane.b32.xlu0 %v860, 112
      %v880 = vpop.permute.xlu0 %879
      %v881 = vsel %vm806, %v874, %v876
      %v882 = vsel %vm806, %v878, %v880
      %v885 = vsel %vm510, %v481, 0
      %v887 = vsel %vm510, %v483, 0
      %889 = vmatprep.subr.mxu0 0.0
      %890 = vmatpush1.msra.mxu0 %v316
      %891 = vmatprep.subr.mxu0 0.0
      %892 = vmatpush1.msra.mxu0 %v315
      %893 = vmatprep.subr.mxu0 0.0
      %894 = vmatpush1.msra.mxu0 %v314
      %895 = vmatprep.subr.mxu0 0.0
      %896 = vmatpush1.msra.mxu0 %v313
      %897 = vmatprep.subr.mxu0 0.0
      %898 = vmatpush1.msra.mxu0 %v312
      %899 = vmatprep.subr.mxu0 0.0
      %900 = vmatpush1.msra.mxu0 %v311
      %901 = vmatprep.subr.mxu0 0.0
      %902 = vmatpush1.msra.mxu0 %v310
      %903 = vmatprep.subr.mxu0 0.0
      %904 = vmatpush1.msra.mxu0 %v309
      %905 = vmatprep.subr.mxu0 0.0
      %906 = vmatpush1.msra.mxu0 %v308
      %907 = vmatprep.subr.mxu0 0.0
      %908 = vmatpush1.msra.mxu0 %v307
      %909 = vmatprep.subr.mxu0 0.0
      %910 = vmatpush1.msra.mxu0 %v306
      %911 = vmatprep.subr.mxu0 0.0
      %912 = vmatpush1.msra.mxu0 %v305
      %913 = vmatprep.subr.mxu0 0.0
      %914 = vmatpush1.msra.mxu0 %v304
      %915 = vmatprep.subr.mxu0 0.0
      %916 = vmatpush1.msra.mxu0 %v303
      %917 = vmatprep.subr.mxu0 0.0
      %918 = vmatpush1.msra.mxu0 %v302
      %919 = vmatprep.subr.mxu0 0.0
      %920 = vmatpush1.msra.mxu0 %v301
      %921 = vmatprep.subr.mxu0 0.0
      %922 = vmatpush2.msra.mxu0 %v332
      %923 = vmatprep.subr.mxu0 0.0
      %924 = vmatpush2.msra.mxu0 %v331
      %925 = vmatprep.subr.mxu0 0.0
      %926 = vmatpush2.msra.mxu0 %v330
      %927 = vmatprep.subr.mxu0 0.0
      %928 = vmatpush2.msra.mxu0 %v329
      %929 = vmatprep.subr.mxu0 0.0
      %930 = vmatpush2.msra.mxu0 %v328
      %931 = vmatprep.subr.mxu0 0.0
      %932 = vmatpush2.msra.mxu0 %v327
      %933 = vmatprep.subr.mxu0 0.0
      %934 = vmatpush2.msra.mxu0 %v326
      %935 = vmatprep.subr.mxu0 0.0
      %936 = vmatpush2.msra.mxu0 %v325
      %937 = vmatprep.subr.mxu0 0.0
      %938 = vmatpush2.msra.mxu0 %v324
      %939 = vmatprep.subr.mxu0 0.0
      %940 = vmatpush2.msra.mxu0 %v323
      %941 = vmatprep.subr.mxu0 0.0
      %942 = vmatpush2.msra.mxu0 %v322
      %943 = vmatprep.subr.mxu0 0.0
      %944 = vmatpush2.msra.mxu0 %v321
      %945 = vmatprep.subr.mxu0 0.0
      %946 = vmatpush2.msra.mxu0 %v320
      %947 = vmatprep.subr.mxu0 0.0
      %948 = vmatpush2.msra.mxu0 %v319
      %949 = vmatprep.subr.mxu0 0.0
      %950 = vmatpush2.msra.mxu0 %v318
      %951 = vmatprep.subr.mxu0 0.0
      %952 = vmatpush2.msra.mxu0 %v317
      %953 = vmatprep.mubr.f32.mxu0 %v794
      %954 = vmatmul.mubr.f32.gmra.mxu0 %v779
      %v955 = vpop.f32.mrf.mxu0
      %v956 = vadd.f32 0.0, %v955
      %v957 = vpop.f32.mrf.mxu0
      %958 = vmatprep.mubr.f32.mxu0 %v795
      %959 = vmatmul.mubr.f32.gmra.mxu0 %v771
      %v960 = vpop.f32.mrf.mxu0
      %v961 = vadd.f32 0.0, %v960
      %v962 = vpop.f32.mrf.mxu0
      %963 = vdwg.mxu0
      %964 = vmatprep.subr.mxu0 0.0
      %965 = vmatpush1.msra.mxu0 %v348
      %966 = vmatprep.subr.mxu0 0.0
      %967 = vmatpush1.msra.mxu0 %v347
      %968 = vmatprep.subr.mxu0 0.0
      %969 = vmatpush1.msra.mxu0 %v346
      %970 = vmatprep.subr.mxu0 0.0
      %971 = vmatpush1.msra.mxu0 %v345
      %972 = vmatprep.subr.mxu0 0.0
      %973 = vmatpush1.msra.mxu0 %v344
      %974 = vmatprep.subr.mxu0 0.0
      %975 = vmatpush1.msra.mxu0 %v343
      %976 = vmatprep.subr.mxu0 0.0
      %977 = vmatpush1.msra.mxu0 %v342
      %978 = vmatprep.subr.mxu0 0.0
      %979 = vmatpush1.msra.mxu0 %v341
      %980 = vmatprep.subr.mxu0 0.0
      %981 = vmatpush1.msra.mxu0 %v340
      %982 = vmatprep.subr.mxu0 0.0
      %983 = vmatpush1.msra.mxu0 %v339
      %984 = vmatprep.subr.mxu0 0.0
      %985 = vmatpush1.msra.mxu0 %v338
      %986 = vmatprep.subr.mxu0 0.0
      %987 = vmatpush1.msra.mxu0 %v337
      %988 = vmatprep.subr.mxu0 0.0
      %989 = vmatpush1.msra.mxu0 %v336
      %990 = vmatprep.subr.mxu0 0.0
      %991 = vmatpush1.msra.mxu0 %v335
      %992 = vmatprep.subr.mxu0 0.0
      %993 = vmatpush1.msra.mxu0 %v334
      %994 = vmatprep.subr.mxu0 0.0
      %995 = vmatpush1.msra.mxu0 %v333
      %996 = vmatprep.subr.mxu0 0.0
      %997 = vmatpush2.msra.mxu0 %v364
      %998 = vmatprep.subr.mxu0 0.0
      %999 = vmatpush2.msra.mxu0 %v363
      %1000 = vmatprep.subr.mxu0 0.0
      %1001 = vmatpush2.msra.mxu0 %v362
      %1002 = vmatprep.subr.mxu0 0.0
      %1003 = vmatpush2.msra.mxu0 %v361
      %1004 = vmatprep.subr.mxu0 0.0
      %1005 = vmatpush2.msra.mxu0 %v360
      %1006 = vmatprep.subr.mxu0 0.0
      %1007 = vmatpush2.msra.mxu0 %v359
      %1008 = vmatprep.subr.mxu0 0.0
      %1009 = vmatpush2.msra.mxu0 %v358
      %1010 = vmatprep.subr.mxu0 0.0
      %1011 = vmatpush2.msra.mxu0 %v357
      %1012 = vmatprep.subr.mxu0 0.0
      %1013 = vmatpush2.msra.mxu0 %v356
      %1014 = vmatprep.subr.mxu0 0.0
      %1015 = vmatpush2.msra.mxu0 %v355
      %1016 = vmatprep.subr.mxu0 0.0
      %1017 = vmatpush2.msra.mxu0 %v354
      %1018 = vmatprep.subr.mxu0 0.0
      %1019 = vmatpush2.msra.mxu0 %v353
      %1020 = vmatprep.subr.mxu0 0.0
      %1021 = vmatpush2.msra.mxu0 %v352
      %1022 = vmatprep.subr.mxu0 0.0
      %1023 = vmatpush2.msra.mxu0 %v351
      %1024 = vmatprep.subr.mxu0 0.0
      %1025 = vmatpush2.msra.mxu0 %v350
      %1026 = vmatprep.subr.mxu0 0.0
      %1027 = vmatpush2.msra.mxu0 %v349
      %1028 = vmatprep.mubr.f32.mxu0 %v814
      %1029 = vmatmul.mubr.f32.gmra.mxu0 %v807
      %v1030 = vpop.f32.mrf.mxu0
      %v1031 = vadd.f32 %v956, %v1030
      %v1032 = vpop.f32.mrf.mxu0
      %1033 = vmatprep.mubr.f32.mxu0 %v816
      %1034 = vmatmul.mubr.f32.gmra.mxu0 %v808
      %v1035 = vpop.f32.mrf.mxu0
      %v1036 = vadd.f32 %v961, %v1035
      %v1037 = vpop.f32.mrf.mxu0
      %1038 = vdwg.mxu0
      %1039 = vmatprep.subr.mxu0 0.0
      %1040 = vmatpush1.msra.mxu0 %v380
      %1041 = vmatprep.subr.mxu0 0.0
      %1042 = vmatpush1.msra.mxu0 %v379
      %1043 = vmatprep.subr.mxu0 0.0
      %1044 = vmatpush1.msra.mxu0 %v378
      %1045 = vmatprep.subr.mxu0 0.0
      %1046 = vmatpush1.msra.mxu0 %v377
      %1047 = vmatprep.subr.mxu0 0.0
      %1048 = vmatpush1.msra.mxu0 %v376
      %1049 = vmatprep.subr.mxu0 0.0
      %1050 = vmatpush1.msra.mxu0 %v375
      %1051 = vmatprep.subr.mxu0 0.0
      %1052 = vmatpush1.msra.mxu0 %v374
      %1053 = vmatprep.subr.mxu0 0.0
      %1054 = vmatpush1.msra.mxu0 %v373
      %1055 = vmatprep.subr.mxu0 0.0
      %1056 = vmatpush1.msra.mxu0 %v372
      %1057 = vmatprep.subr.mxu0 0.0
      %1058 = vmatpush1.msra.mxu0 %v371
      %1059 = vmatprep.subr.mxu0 0.0
      %1060 = vmatpush1.msra.mxu0 %v370
      %1061 = vmatprep.subr.mxu0 0.0
      %1062 = vmatpush1.msra.mxu0 %v369
      %1063 = vmatprep.subr.mxu0 0.0
      %1064 = vmatpush1.msra.mxu0 %v368
      %1065 = vmatprep.subr.mxu0 0.0
      %1066 = vmatpush1.msra.mxu0 %v367
      %1067 = vmatprep.subr.mxu0 0.0
      %1068 = vmatpush1.msra.mxu0 %v366
      %1069 = vmatprep.subr.mxu0 0.0
      %1070 = vmatpush1.msra.mxu0 %v365
      %1071 = vmatprep.subr.mxu0 0.0
      %1072 = vmatpush2.msra.mxu0 %v396
      %1073 = vmatprep.subr.mxu0 0.0
      %1074 = vmatpush2.msra.mxu0 %v395
      %1075 = vmatprep.subr.mxu0 0.0
      %1076 = vmatpush2.msra.mxu0 %v394
      %1077 = vmatprep.subr.mxu0 0.0
      %1078 = vmatpush2.msra.mxu0 %v393
      %1079 = vmatprep.subr.mxu0 0.0
      %1080 = vmatpush2.msra.mxu0 %v392
      %1081 = vmatprep.subr.mxu0 0.0
      %1082 = vmatpush2.msra.mxu0 %v391
      %1083 = vmatprep.subr.mxu0 0.0
      %1084 = vmatpush2.msra.mxu0 %v390
      %1085 = vmatprep.subr.mxu0 0.0
      %1086 = vmatpush2.msra.mxu0 %v389
      %1087 = vmatprep.subr.mxu0 0.0
      %1088 = vmatpush2.msra.mxu0 %v388
      %1089 = vmatprep.subr.mxu0 0.0
      %1090 = vmatpush2.msra.mxu0 %v387
      %1091 = vmatprep.subr.mxu0 0.0
      %1092 = vmatpush2.msra.mxu0 %v386
      %1093 = vmatprep.subr.mxu0 0.0
      %1094 = vmatpush2.msra.mxu0 %v385
      %1095 = vmatprep.subr.mxu0 0.0
      %1096 = vmatpush2.msra.mxu0 %v384
      %1097 = vmatprep.subr.mxu0 0.0
      %1098 = vmatpush2.msra.mxu0 %v383
      %1099 = vmatprep.subr.mxu0 0.0
      %1100 = vmatpush2.msra.mxu0 %v382
      %1101 = vmatprep.subr.mxu0 0.0
      %1102 = vmatpush2.msra.mxu0 %v381
      %1103 = vmatprep.mubr.f32.mxu0 %v845
      %1104 = vmatmul.mubr.f32.gmra.mxu0 %v833
      %v1105 = vpop.f32.mrf.mxu0
      %v1106 = vadd.f32 %v1031, %v1105
      %v1107 = vpop.f32.mrf.mxu0
      %1108 = vmatprep.mubr.f32.mxu0 %v846
      %1109 = vmatmul.mubr.f32.gmra.mxu0 %v834
      %v1110 = vpop.f32.mrf.mxu0
      %v1111 = vadd.f32 %v1036, %v1110
      %v1112 = vpop.f32.mrf.mxu0
      %1113 = vdwg.mxu0
      %1114 = vmatprep.subr.mxu0 0.0
      %1115 = vmatpush1.msra.mxu0 %v412
      %1116 = vmatprep.subr.mxu0 0.0
      %1117 = vmatpush1.msra.mxu0 %v411
      %1118 = vmatprep.subr.mxu0 0.0
      %1119 = vmatpush1.msra.mxu0 %v410
      %1120 = vmatprep.subr.mxu0 0.0
      %1121 = vmatpush1.msra.mxu0 %v409
      %1122 = vmatprep.subr.mxu0 0.0
      %1123 = vmatpush1.msra.mxu0 %v408
      %1124 = vmatprep.subr.mxu0 0.0
      %1125 = vmatpush1.msra.mxu0 %v407
      %1126 = vmatprep.subr.mxu0 0.0
      %1127 = vmatpush1.msra.mxu0 %v406
      %1128 = vmatprep.subr.mxu0 0.0
      %1129 = vmatpush1.msra.mxu0 %v405
      %1130 = vmatprep.subr.mxu0 0.0
      %1131 = vmatpush1.msra.mxu0 %v404
      %1132 = vmatprep.subr.mxu0 0.0
      %1133 = vmatpush1.msra.mxu0 %v403
      %1134 = vmatprep.subr.mxu0 0.0
      %1135 = vmatpush1.msra.mxu0 %v402
      %1136 = vmatprep.subr.mxu0 0.0
      %1137 = vmatpush1.msra.mxu0 %v401
      %1138 = vmatprep.subr.mxu0 0.0
      %1139 = vmatpush1.msra.mxu0 %v400
      %1140 = vmatprep.subr.mxu0 0.0
      %1141 = vmatpush1.msra.mxu0 %v399
      %1142 = vmatprep.subr.mxu0 0.0
      %1143 = vmatpush1.msra.mxu0 %v398
      %1144 = vmatprep.subr.mxu0 0.0
      %1145 = vmatpush1.msra.mxu0 %v397
      %1146 = vmatprep.subr.mxu0 0.0
      %1147 = vmatpush2.msra.mxu0 %v428
      %1148 = vmatprep.subr.mxu0 0.0
      %1149 = vmatpush2.msra.mxu0 %v427
      %1150 = vmatprep.subr.mxu0 0.0
      %1151 = vmatpush2.msra.mxu0 %v426
      %1152 = vmatprep.subr.mxu0 0.0
      %1153 = vmatpush2.msra.mxu0 %v425
      %1154 = vmatprep.subr.mxu0 0.0
      %1155 = vmatpush2.msra.mxu0 %v424
      %1156 = vmatprep.subr.mxu0 0.0
      %1157 = vmatpush2.msra.mxu0 %v423
      %1158 = vmatprep.subr.mxu0 0.0
      %1159 = vmatpush2.msra.mxu0 %v422
      %1160 = vmatprep.subr.mxu0 0.0
      %1161 = vmatpush2.msra.mxu0 %v421
      %1162 = vmatprep.subr.mxu0 0.0
      %1163 = vmatpush2.msra.mxu0 %v420
      %1164 = vmatprep.subr.mxu0 0.0
      %1165 = vmatpush2.msra.mxu0 %v419
      %1166 = vmatprep.subr.mxu0 0.0
      %1167 = vmatpush2.msra.mxu0 %v418
      %1168 = vmatprep.subr.mxu0 0.0
      %1169 = vmatpush2.msra.mxu0 %v417
      %1170 = vmatprep.subr.mxu0 0.0
      %1171 = vmatpush2.msra.mxu0 %v416
      %1172 = vmatprep.subr.mxu0 0.0
      %1173 = vmatpush2.msra.mxu0 %v415
      %1174 = vmatprep.subr.mxu0 0.0
      %1175 = vmatpush2.msra.mxu0 %v414
      %1176 = vmatprep.subr.mxu0 0.0
      %1177 = vmatpush2.msra.mxu0 %v413
      %1178 = vmatprep.mubr.f32.mxu0 %v869
      %1179 = vmatmul.mubr.f32.gmra.mxu0 %v851
      %v1180 = vpop.f32.mrf.mxu0
      %v1181 = vadd.f32 %v1106, %v1180
      %v1182 = vpop.f32.mrf.mxu0
      %1183 = vmatprep.mubr.f32.mxu0 %v870
      %1184 = vmatmul.mubr.f32.gmra.mxu0 %v853
      %v1185 = vpop.f32.mrf.mxu0
      %v1186 = vadd.f32 %v1111, %v1185
      %v1187 = vpop.f32.mrf.mxu0
      %1188 = vdwg.mxu0
      %1189 = vmatprep.subr.mxu0 0.0
      %1190 = vmatpush1.msra.mxu0 %v444
      %1191 = vmatprep.subr.mxu0 0.0
      %1192 = vmatpush1.msra.mxu0 %v443
      %1193 = vmatprep.subr.mxu0 0.0
      %1194 = vmatpush1.msra.mxu0 %v442
      %1195 = vmatprep.subr.mxu0 0.0
      %1196 = vmatpush1.msra.mxu0 %v441
      %1197 = vmatprep.subr.mxu0 0.0
      %1198 = vmatpush1.msra.mxu0 %v440
      %1199 = vmatprep.subr.mxu0 0.0
      %1200 = vmatpush1.msra.mxu0 %v439
      %1201 = vmatprep.subr.mxu0 0.0
      %1202 = vmatpush1.msra.mxu0 %v438
      %1203 = vmatprep.subr.mxu0 0.0
      %1204 = vmatpush1.msra.mxu0 %v437
      %1205 = vmatprep.subr.mxu0 0.0
      %1206 = vmatpush1.msra.mxu0 %v436
      %1207 = vmatprep.subr.mxu0 0.0
      %1208 = vmatpush1.msra.mxu0 %v435
      %1209 = vmatprep.subr.mxu0 0.0
      %1210 = vmatpush1.msra.mxu0 %v434
      %1211 = vmatprep.subr.mxu0 0.0
      %1212 = vmatpush1.msra.mxu0 %v433
      %1213 = vmatprep.subr.mxu0 0.0
      %1214 = vmatpush1.msra.mxu0 %v432
      %1215 = vmatprep.subr.mxu0 0.0
      %1216 = vmatpush1.msra.mxu0 %v431
      %1217 = vmatprep.subr.mxu0 0.0
      %1218 = vmatpush1.msra.mxu0 %v430
      %1219 = vmatprep.subr.mxu0 0.0
      %1220 = vmatpush1.msra.mxu0 %v429
      %1221 = vmatprep.subr.mxu0 0.0
      %1222 = vmatpush2.msra.mxu0 0.0
      %1223 = vmatprep.subr.mxu0 0.0
      %1224 = vmatpush2.msra.mxu0 0.0
      %1225 = vmatprep.subr.mxu0 0.0
      %1226 = vmatpush2.msra.mxu0 0.0
      %1227 = vmatprep.subr.mxu0 0.0
      %1228 = vmatpush2.msra.mxu0 0.0
      %1229 = vmatprep.subr.mxu0 0.0
      %1230 = vmatpush2.msra.mxu0 0.0
      %1231 = vmatprep.subr.mxu0 0.0
      %1232 = vmatpush2.msra.mxu0 0.0
      %1233 = vmatprep.subr.mxu0 0.0
      %1234 = vmatpush2.msra.mxu0 0.0
      %1235 = vmatprep.subr.mxu0 0.0
      %1236 = vmatpush2.msra.mxu0 0.0
      %1237 = vmatprep.subr.mxu0 0.0
      %1238 = vmatpush2.msra.mxu0 %v452
      %1239 = vmatprep.subr.mxu0 0.0
      %1240 = vmatpush2.msra.mxu0 %v451
      %1241 = vmatprep.subr.mxu0 0.0
      %1242 = vmatpush2.msra.mxu0 %v450
      %1243 = vmatprep.subr.mxu0 0.0
      %1244 = vmatpush2.msra.mxu0 %v449
      %1245 = vmatprep.subr.mxu0 0.0
      %1246 = vmatpush2.msra.mxu0 %v448
      %1247 = vmatprep.subr.mxu0 0.0
      %1248 = vmatpush2.msra.mxu0 %v447
      %1249 = vmatprep.subr.mxu0 0.0
      %1250 = vmatpush2.msra.mxu0 %v446
      %1251 = vmatprep.subr.mxu0 0.0
      %1252 = vmatpush2.msra.mxu0 %v445
      %1253 = vmatprep.mubr.f32.mxu0 %v885
      %1254 = vmatmul.mubr.f32.gmra.mxu0 %v881
      %v1255 = vpop.f32.mrf.mxu0
      %v1256 = vadd.f32 %v1181, %v1255
      %v1257 = vpop.f32.mrf.mxu0
      %1258 = vmatprep.mubr.f32.mxu0 %v887
      %1259 = vmatmul.mubr.f32.gmra.mxu0 %v882
      %v1260 = vpop.f32.mrf.mxu0
      %v1261 = vadd.f32 %v1186, %v1260
      %v1262 = vpop.f32.mrf.mxu0
      %1263 = vdwg.mxu0
      %v1264 = vmax.f32 %v1256, 0.0
      %v1265 = vmax.f32 %v1261, 0.0
      %1268 = vrot.lane.b32.xlu0 %v1264, 8
      %v1269 = vpop.permute.xlu0 %1268
      %1270 = vrot.lane.b32.xlu0 %v1265, 8
      %v1271 = vpop.permute.xlu0 %1270
      %v1274 = vsel %vm758, 0.0, %v1269
      %v1275 = vsel %vm758, 0.0, %v1271
      %v1276 = vsel %vm758, %v1269, 0.0
      %v1277 = vsel %vm758, %v1271, 0.0
      %v1282 = vrot.slane %v1274, 7
      %v1283 = vrot.slane %v1276, 7
      %v1284 = vrot.slane %v1275, 7
      %v1285 = vsel %vm767, %v1282, %v1284
      %v1286 = vrot.slane %v1277, 7
      %v1287 = vsel %vm767, %v1283, %v1286
      %v1293 = vsel %vm767, 0.0, %v1282
      %v1294 = vsel %vm767, 0.0, %v1283
      %v1295 = vsel %vm767, %v1284, 0.0
      %v1296 = vsel %vm767, %v1286, 0.0
      %v1297 = vld [vmem:[%s3] sm:$0xff]
      %v1298 = vld [vmem:[%s3 + $0x8] sm:$0xff]
      %v1299 = vld [vmem:[%s3 + $0x10] sm:$0xff]
      %v1300 = vld [vmem:[%s3 + $0x18] sm:$0xff]
      %v1301 = vld [vmem:[%s3 + $0x20] sm:$0xff]
      %v1302 = vld [vmem:[%s3 + $0x28] sm:$0xff]
      %v1303 = vld [vmem:[%s3 + $0x30] sm:$0xff]
      %v1304 = vld [vmem:[%s3 + $0x38] sm:$0xff]
      %v1305 = vld [vmem:[%s3 + $0x40] sm:$0xff]
      %v1306 = vld [vmem:[%s3 + $0x48] sm:$0xff]
      %v1307 = vld [vmem:[%s3 + $0x50] sm:$0xff]
      %v1308 = vld [vmem:[%s3 + $0x58] sm:$0xff]
      %v1309 = vld [vmem:[%s3 + $0x60] sm:$0xff]
      %v1310 = vld [vmem:[%s3 + $0x68] sm:$0xff]
      %v1311 = vld [vmem:[%s3 + $0x70] sm:$0xff]
      %v1312 = vld [vmem:[%s3 + $0x78] sm:$0xff]
      %v1313 = vld [vmem:[%s3 + $0x80] sm:$0xff]
      %v1314 = vld [vmem:[%s3 + $0x88] sm:$0xff]
      %v1315 = vld [vmem:[%s3 + $0x90] sm:$0xff]
      %v1316 = vld [vmem:[%s3 + $0x98] sm:$0xff]
      %v1317 = vld [vmem:[%s3 + $0xa0] sm:$0xff]
      %v1318 = vld [vmem:[%s3 + $0xa8] sm:$0xff]
      %v1319 = vld [vmem:[%s3 + $0xb0] sm:$0xff]
      %v1320 = vld [vmem:[%s3 + $0xb8] sm:$0xff]
      %v1321 = vld [vmem:[%s3 + $0xc0] sm:$0xff]
      %v1322 = vld [vmem:[%s3 + $0xc8] sm:$0xff]
      %v1323 = vld [vmem:[%s3 + $0xd0] sm:$0xff]
      %v1324 = vld [vmem:[%s3 + $0xd8] sm:$0xff]
      %v1325 = vld [vmem:[%s3 + $0xe0] sm:$0xff]
      %v1326 = vld [vmem:[%s3 + $0xe8] sm:$0xff]
      %v1327 = vld [vmem:[%s3 + $0xf0] sm:$0xff]
      %v1328 = vld [vmem:[%s3 + $0xf8] sm:$0xff]
      %v1329 = vld [vmem:[%s3 + $0x100] sm:$0xff]
      %v1330 = vld [vmem:[%s3 + $0x108] sm:$0xff]
      %v1331 = vld [vmem:[%s3 + $0x110] sm:$0xff]
      %v1332 = vld [vmem:[%s3 + $0x118] sm:$0xff]
      %v1333 = vld [vmem:[%s3 + $0x120] sm:$0xff]
      %v1334 = vld [vmem:[%s3 + $0x128] sm:$0xff]
      %v1335 = vld [vmem:[%s3 + $0x130] sm:$0xff]
      %v1336 = vld [vmem:[%s3 + $0x138] sm:$0xff]
      %v1337 = vld [vmem:[%s3 + $0x140] sm:$0xff]
      %v1338 = vld [vmem:[%s3 + $0x148] sm:$0xff]
      %v1339 = vld [vmem:[%s3 + $0x150] sm:$0xff]
      %v1340 = vld [vmem:[%s3 + $0x158] sm:$0xff]
      %v1341 = vld [vmem:[%s3 + $0x160] sm:$0xff]
      %v1342 = vld [vmem:[%s3 + $0x168] sm:$0xff]
      %v1343 = vld [vmem:[%s3 + $0x170] sm:$0xff]
      %v1344 = vld [vmem:[%s3 + $0x178] sm:$0xff]
      %v1345 = vld [vmem:[%s3 + $0x180] sm:$0xff]
      %v1346 = vld [vmem:[%s3 + $0x188] sm:$0xff]
      %v1347 = vld [vmem:[%s3 + $0x190] sm:$0xff]
      %v1348 = vld [vmem:[%s3 + $0x198] sm:$0xff]
      %v1349 = vld [vmem:[%s3 + $0x1a0] sm:$0xff]
      %v1350 = vld [vmem:[%s3 + $0x1a8] sm:$0xff]
      %v1351 = vld [vmem:[%s3 + $0x1b0] sm:$0xff]
      %v1352 = vld [vmem:[%s3 + $0x1b8] sm:$0xff]
      %v1353 = vld [vmem:[%s3 + $0x1c0] sm:$0xff]
      %v1354 = vld [vmem:[%s3 + $0x1c8] sm:$0xff]
      %v1355 = vld [vmem:[%s3 + $0x1d0] sm:$0xff]
      %v1356 = vld [vmem:[%s3 + $0x1d8] sm:$0xff]
      %v1357 = vld [vmem:[%s3 + $0x1e0] sm:$0xff]
      %v1358 = vld [vmem:[%s3 + $0x1e8] sm:$0xff]
      %v1359 = vld [vmem:[%s3 + $0x1f0] sm:$0xff]
      %v1360 = vld [vmem:[%s3 + $0x1f8] sm:$0xff]
      %v1361 = vld [vmem:[%s3 + $0x200] sm:$0xff]
      %v1362 = vld [vmem:[%s3 + $0x208] sm:$0xff]
      %v1363 = vld [vmem:[%s3 + $0x210] sm:$0xff]
      %v1364 = vld [vmem:[%s3 + $0x218] sm:$0xff]
      %v1365 = vld [vmem:[%s3 + $0x220] sm:$0xff]
      %v1366 = vld [vmem:[%s3 + $0x228] sm:$0xff]
      %v1367 = vld [vmem:[%s3 + $0x230] sm:$0xff]
      %v1368 = vld [vmem:[%s3 + $0x238] sm:$0xff]
      %v1369 = vld [vmem:[%s3 + $0x240] sm:$0xff]
      %v1370 = vld [vmem:[%s3 + $0x248] sm:$0xff]
      %v1371 = vld [vmem:[%s3 + $0x250] sm:$0xff]
      %v1372 = vld [vmem:[%s3 + $0x258] sm:$0xff]
      %v1373 = vld [vmem:[%s3 + $0x260] sm:$0xff]
      %v1374 = vld [vmem:[%s3 + $0x268] sm:$0xff]
      %v1375 = vld [vmem:[%s3 + $0x270] sm:$0xff]
      %v1376 = vld [vmem:[%s3 + $0x278] sm:$0xff]
      %v1377 = vld [vmem:[%s3 + $0x280] sm:$0xff]
      %v1378 = vld [vmem:[%s3 + $0x288] sm:$0xff]
      %v1379 = vld [vmem:[%s3 + $0x290] sm:$0xff]
      %v1380 = vld [vmem:[%s3 + $0x298] sm:$0xff]
      %v1381 = vld [vmem:[%s3 + $0x2a0] sm:$0xff]
      %v1382 = vld [vmem:[%s3 + $0x2a8] sm:$0xff]
      %v1383 = vld [vmem:[%s3 + $0x2b0] sm:$0xff]
      %v1384 = vld [vmem:[%s3 + $0x2b8] sm:$0xff]
      %v1385 = vld [vmem:[%s3 + $0x2c0] sm:$0xff]
      %v1386 = vld [vmem:[%s3 + $0x2c8] sm:$0xff]
      %v1387 = vld [vmem:[%s3 + $0x2d0] sm:$0xff]
      %v1388 = vld [vmem:[%s3 + $0x2d8] sm:$0xff]
      %v1389 = vld [vmem:[%s3 + $0x2e0] sm:$0xff]
      %v1390 = vld [vmem:[%s3 + $0x2e8] sm:$0xff]
      %v1391 = vld [vmem:[%s3 + $0x2f0] sm:$0xff]
      %v1392 = vld [vmem:[%s3 + $0x2f8] sm:$0xff]
      %v1393 = vld [vmem:[%s3 + $0x300] sm:$0xff]
      %v1394 = vld [vmem:[%s3 + $0x308] sm:$0xff]
      %v1395 = vld [vmem:[%s3 + $0x310] sm:$0xff]
      %v1396 = vld [vmem:[%s3 + $0x318] sm:$0xff]
      %v1397 = vld [vmem:[%s3 + $0x320] sm:$0xff]
      %v1398 = vld [vmem:[%s3 + $0x328] sm:$0xff]
      %v1399 = vld [vmem:[%s3 + $0x330] sm:$0xff]
      %v1400 = vld [vmem:[%s3 + $0x338] sm:$0xff]
      %v1401 = vld [vmem:[%s3 + $0x340] sm:$0xff]
      %v1402 = vld [vmem:[%s3 + $0x348] sm:$0xff]
      %v1403 = vld [vmem:[%s3 + $0x350] sm:$0xff]
      %v1404 = vld [vmem:[%s3 + $0x358] sm:$0xff]
      %v1405 = vld [vmem:[%s3 + $0x360] sm:$0xff]
      %v1406 = vld [vmem:[%s3 + $0x368] sm:$0xff]
      %v1407 = vld [vmem:[%s3 + $0x370] sm:$0xff]
      %v1408 = vld [vmem:[%s3 + $0x378] sm:$0xff]
      %v1409 = vld [vmem:[%s3 + $0x380] sm:$0xff]
      %v1410 = vld [vmem:[%s3 + $0x388] sm:$0xff]
      %v1411 = vld [vmem:[%s3 + $0x390] sm:$0xff]
      %v1412 = vld [vmem:[%s3 + $0x398] sm:$0xff]
      %v1413 = vld [vmem:[%s3 + $0x3a0] sm:$0xff]
      %v1414 = vld [vmem:[%s3 + $0x3a8] sm:$0xff]
      %v1415 = vld [vmem:[%s3 + $0x3b0] sm:$0xff]
      %v1416 = vld [vmem:[%s3 + $0x3b8] sm:$0xff]
      %v1417 = vld [vmem:[%s3 + $0x3c0] sm:$0xff]
      %v1418 = vld [vmem:[%s3 + $0x3c8] sm:$0xff]
      %v1419 = vld [vmem:[%s3 + $0x3d0] sm:$0xff]
      %v1420 = vld [vmem:[%s3 + $0x3d8] sm:$0xff]
      %v1421 = vld [vmem:[%s3 + $0x3e0] sm:$0xff]
      %v1422 = vld [vmem:[%s3 + $0x3e8] sm:$0xff]
      %v1423 = vld [vmem:[%s3 + $0x3f0] sm:$0xff]
      %v1424 = vld [vmem:[%s3 + $0x3f8] sm:$0xff]
      %v1425 = vld [vmem:[%s3 + $0x400] sm:$0xff]
      %v1426 = vld [vmem:[%s3 + $0x408] sm:$0xff]
      %v1427 = vld [vmem:[%s3 + $0x410] sm:$0xff]
      %v1428 = vld [vmem:[%s3 + $0x418] sm:$0xff]
      %v1429 = vld [vmem:[%s3 + $0x420] sm:$0xff]
      %v1430 = vld [vmem:[%s3 + $0x428] sm:$0xff]
      %v1431 = vld [vmem:[%s3 + $0x430] sm:$0xff]
      %v1432 = vld [vmem:[%s3 + $0x438] sm:$0xff]
      %v1433 = vld [vmem:[%s3 + $0x440] sm:$0xff]
      %v1434 = vld [vmem:[%s3 + $0x448] sm:$0xff]
      %v1435 = vld [vmem:[%s3 + $0x450] sm:$0xff]
      %v1436 = vld [vmem:[%s3 + $0x458] sm:$0xff]
      %v1437 = vld [vmem:[%s3 + $0x460] sm:$0xff]
      %v1438 = vld [vmem:[%s3 + $0x468] sm:$0xff]
      %v1439 = vld [vmem:[%s3 + $0x470] sm:$0xff]
      %v1440 = vld [vmem:[%s3 + $0x478] sm:$0xff]
      %v1441 = vld [vmem:[%s4] sm:$0xff]
      %v1442 = vld [vmem:[%s4 + $0x8] sm:$0xff]
      %v1443 = vld [vmem:[%s4 + $0x10] sm:$0xff]
      %v1444 = vld [vmem:[%s4 + $0x18] sm:$0xff]
      %v1445 = vld [vmem:[%s4 + $0x20] sm:$0xff]
      %v1446 = vld [vmem:[%s4 + $0x28] sm:$0xff]
      %v1447 = vld [vmem:[%s4 + $0x30] sm:$0xff]
      %v1448 = vld [vmem:[%s4 + $0x38] sm:$0xff]
      %v1449 = vld [vmem:[%s4 + $0x40] sm:$0xff]
      %v1450 = vld [vmem:[%s4 + $0x48] sm:$0xff]
      %v1451 = vld [vmem:[%s4 + $0x50] sm:$0xff]
      %v1452 = vld [vmem:[%s4 + $0x58] sm:$0xff]
      %v1453 = vld [vmem:[%s4 + $0x60] sm:$0xff]
      %v1454 = vld [vmem:[%s4 + $0x68] sm:$0xff]
      %v1455 = vld [vmem:[%s4 + $0x70] sm:$0xff]
      %v1456 = vld [vmem:[%s4 + $0x78] sm:$0xff]
      %v1457 = vld [vmem:[%s4 + $0x80] sm:$0xff]
      %v1458 = vld [vmem:[%s4 + $0x88] sm:$0xff]
      %v1459 = vld [vmem:[%s4 + $0x90] sm:$0xff]
      %v1460 = vld [vmem:[%s4 + $0x98] sm:$0xff]
      %v1461 = vld [vmem:[%s4 + $0xa0] sm:$0xff]
      %v1462 = vld [vmem:[%s4 + $0xa8] sm:$0xff]
      %v1463 = vld [vmem:[%s4 + $0xb0] sm:$0xff]
      %v1464 = vld [vmem:[%s4 + $0xb8] sm:$0xff]
      %v1465 = vld [vmem:[%s4 + $0xc0] sm:$0xff]
      %v1466 = vld [vmem:[%s4 + $0xc8] sm:$0xff]
      %v1467 = vld [vmem:[%s4 + $0xd0] sm:$0xff]
      %v1468 = vld [vmem:[%s4 + $0xd8] sm:$0xff]
      %v1469 = vld [vmem:[%s4 + $0xe0] sm:$0xff]
      %v1470 = vld [vmem:[%s4 + $0xe8] sm:$0xff]
      %v1471 = vld [vmem:[%s4 + $0xf0] sm:$0xff]
      %v1472 = vld [vmem:[%s4 + $0xf8] sm:$0xff]
      %v1473 = vld [vmem:[%s4 + $0x100] sm:$0xff]
      %v1474 = vld [vmem:[%s4 + $0x108] sm:$0xff]
      %v1475 = vld [vmem:[%s4 + $0x110] sm:$0xff]
      %v1476 = vld [vmem:[%s4 + $0x118] sm:$0xff]
      %v1477 = vld [vmem:[%s4 + $0x120] sm:$0xff]
      %v1478 = vld [vmem:[%s4 + $0x128] sm:$0xff]
      %v1479 = vld [vmem:[%s4 + $0x130] sm:$0xff]
      %v1480 = vld [vmem:[%s4 + $0x138] sm:$0xff]
      %v1481 = vld [vmem:[%s4 + $0x140] sm:$0xff]
      %v1482 = vld [vmem:[%s4 + $0x148] sm:$0xff]
      %v1483 = vld [vmem:[%s4 + $0x150] sm:$0xff]
      %v1484 = vld [vmem:[%s4 + $0x158] sm:$0xff]
      %v1485 = vld [vmem:[%s4 + $0x160] sm:$0xff]
      %v1486 = vld [vmem:[%s4 + $0x168] sm:$0xff]
      %v1487 = vld [vmem:[%s4 + $0x170] sm:$0xff]
      %v1488 = vld [vmem:[%s4 + $0x178] sm:$0xff]
      %v1489 = vld [vmem:[%s4 + $0x180] sm:$0xff]
      %v1490 = vld [vmem:[%s4 + $0x188] sm:$0xff]
      %v1491 = vld [vmem:[%s4 + $0x190] sm:$0xff]
      %v1492 = vld [vmem:[%s4 + $0x198] sm:$0xff]
      %v1493 = vld [vmem:[%s4 + $0x1a0] sm:$0xff]
      %v1494 = vld [vmem:[%s4 + $0x1a8] sm:$0xff]
      %v1495 = vld [vmem:[%s4 + $0x1b0] sm:$0xff]
      %v1496 = vld [vmem:[%s4 + $0x1b8] sm:$0xff]
      %v1497 = vld [vmem:[%s4 + $0x1c0] sm:$0xff]
      %v1498 = vld [vmem:[%s4 + $0x1c8] sm:$0xff]
      %v1499 = vld [vmem:[%s4 + $0x1d0] sm:$0xff]
      %v1500 = vld [vmem:[%s4 + $0x1d8] sm:$0xff]
      %v1501 = vld [vmem:[%s4 + $0x1e0] sm:$0xff]
      %v1502 = vld [vmem:[%s4 + $0x1e8] sm:$0xff]
      %v1503 = vld [vmem:[%s4 + $0x1f0] sm:$0xff]
      %v1504 = vld [vmem:[%s4 + $0x1f8] sm:$0xff]
      %v1505 = vld [vmem:[%s4 + $0x200] sm:$0xff]
      %v1506 = vld [vmem:[%s4 + $0x208] sm:$0xff]
      %v1507 = vld [vmem:[%s4 + $0x210] sm:$0xff]
      %v1508 = vld [vmem:[%s4 + $0x218] sm:$0xff]
      %v1509 = vld [vmem:[%s4 + $0x220] sm:$0xff]
      %v1510 = vld [vmem:[%s4 + $0x228] sm:$0xff]
      %v1511 = vld [vmem:[%s4 + $0x230] sm:$0xff]
      %v1512 = vld [vmem:[%s4 + $0x238] sm:$0xff]
      %v1513 = vld [vmem:[%s4 + $0x240] sm:$0xff]
      %v1514 = vld [vmem:[%s4 + $0x248] sm:$0xff]
      %v1515 = vld [vmem:[%s4 + $0x250] sm:$0xff]
      %v1516 = vld [vmem:[%s4 + $0x258] sm:$0xff]
      %v1517 = vld [vmem:[%s4 + $0x260] sm:$0xff]
      %v1518 = vld [vmem:[%s4 + $0x268] sm:$0xff]
      %v1519 = vld [vmem:[%s4 + $0x270] sm:$0xff]
      %v1520 = vld [vmem:[%s4 + $0x278] sm:$0xff]
      %v1521 = vld [vmem:[%s4 + $0x280] sm:$0xff]
      %v1522 = vld [vmem:[%s4 + $0x288] sm:$0xff]
      %v1523 = vld [vmem:[%s4 + $0x290] sm:$0xff]
      %v1524 = vld [vmem:[%s4 + $0x298] sm:$0xff]
      %v1525 = vld [vmem:[%s4 + $0x2a0] sm:$0xff]
      %v1526 = vld [vmem:[%s4 + $0x2a8] sm:$0xff]
      %v1527 = vld [vmem:[%s4 + $0x2b0] sm:$0xff]
      %v1528 = vld [vmem:[%s4 + $0x2b8] sm:$0xff]
      %v1529 = vld [vmem:[%s4 + $0x2c0] sm:$0xff]
      %v1530 = vld [vmem:[%s4 + $0x2c8] sm:$0xff]
      %v1531 = vld [vmem:[%s4 + $0x2d0] sm:$0xff]
      %v1532 = vld [vmem:[%s4 + $0x2d8] sm:$0xff]
      %v1533 = vld [vmem:[%s4 + $0x2e0] sm:$0xff]
      %v1534 = vld [vmem:[%s4 + $0x2e8] sm:$0xff]
      %v1535 = vld [vmem:[%s4 + $0x2f0] sm:$0xff]
      %v1536 = vld [vmem:[%s4 + $0x2f8] sm:$0xff]
      %v1537 = vld [vmem:[%s4 + $0x300] sm:$0xff]
      %v1538 = vld [vmem:[%s4 + $0x308] sm:$0xff]
      %v1539 = vld [vmem:[%s4 + $0x310] sm:$0xff]
      %v1540 = vld [vmem:[%s4 + $0x318] sm:$0xff]
      %v1541 = vld [vmem:[%s4 + $0x320] sm:$0xff]
      %v1542 = vld [vmem:[%s4 + $0x328] sm:$0xff]
      %v1543 = vld [vmem:[%s4 + $0x330] sm:$0xff]
      %v1544 = vld [vmem:[%s4 + $0x338] sm:$0xff]
      %v1545 = vld [vmem:[%s4 + $0x340] sm:$0xff]
      %v1546 = vld [vmem:[%s4 + $0x348] sm:$0xff]
      %v1547 = vld [vmem:[%s4 + $0x350] sm:$0xff]
      %v1548 = vld [vmem:[%s4 + $0x358] sm:$0xff]
      %v1549 = vld [vmem:[%s4 + $0x360] sm:$0xff]
      %v1550 = vld [vmem:[%s4 + $0x368] sm:$0xff]
      %v1551 = vld [vmem:[%s4 + $0x370] sm:$0xff]
      %v1552 = vld [vmem:[%s4 + $0x378] sm:$0xff]
      %v1553 = vld [vmem:[%s4 + $0x380] sm:$0xff]
      %v1554 = vld [vmem:[%s4 + $0x388] sm:$0xff]
      %v1555 = vld [vmem:[%s4 + $0x390] sm:$0xff]
      %v1556 = vld [vmem:[%s4 + $0x398] sm:$0xff]
      %v1557 = vld [vmem:[%s4 + $0x3a0] sm:$0xff]
      %v1558 = vld [vmem:[%s4 + $0x3a8] sm:$0xff]
      %v1559 = vld [vmem:[%s4 + $0x3b0] sm:$0xff]
      %v1560 = vld [vmem:[%s4 + $0x3b8] sm:$0xff]
      %v1561 = vld [vmem:[%s4 + $0x3c0] sm:$0xff]
      %v1562 = vld [vmem:[%s4 + $0x3c8] sm:$0xff]
      %v1563 = vld [vmem:[%s4 + $0x3d0] sm:$0xff]
      %v1564 = vld [vmem:[%s4 + $0x3d8] sm:$0xff]
      %v1565 = vld [vmem:[%s4 + $0x3e0] sm:$0xff]
      %v1566 = vld [vmem:[%s4 + $0x3e8] sm:$0xff]
      %v1567 = vld [vmem:[%s4 + $0x3f0] sm:$0xff]
      %v1568 = vld [vmem:[%s4 + $0x3f8] sm:$0xff]
      %v1569 = vld [vmem:[%s4 + $0x400] sm:$0xff]
      %v1570 = vld [vmem:[%s4 + $0x408] sm:$0xff]
      %v1571 = vld [vmem:[%s4 + $0x410] sm:$0xff]
      %v1572 = vld [vmem:[%s4 + $0x418] sm:$0xff]
      %v1573 = vld [vmem:[%s4 + $0x420] sm:$0xff]
      %v1574 = vld [vmem:[%s4 + $0x428] sm:$0xff]
      %v1575 = vld [vmem:[%s4 + $0x430] sm:$0xff]
      %v1576 = vld [vmem:[%s4 + $0x438] sm:$0xff]
      %v1577 = vld [vmem:[%s4 + $0x440] sm:$0xff]
      %v1578 = vld [vmem:[%s4 + $0x448] sm:$0xff]
      %v1579 = vld [vmem:[%s4 + $0x450] sm:$0xff]
      %v1580 = vld [vmem:[%s4 + $0x458] sm:$0xff]
      %v1581 = vld [vmem:[%s4 + $0x460] sm:$0xff]
      %v1582 = vld [vmem:[%s4 + $0x468] sm:$0xff]
      %v1583 = vld [vmem:[%s4 + $0x470] sm:$0xff]
      %v1584 = vld [vmem:[%s4 + $0x478] sm:$0xff]
      %1587 = vrot.lane.b32.xlu0 %v1293, 120
      %v1588 = vpop.permute.xlu0 %1587
      %1589 = vrot.lane.b32.xlu0 %v1294, 120
      %v1590 = vpop.permute.xlu0 %1589
      %1591 = vrot.lane.b32.xlu0 %v1285, 120
      %v1592 = vpop.permute.xlu0 %1591
      %1593 = vrot.lane.b32.xlu0 %v1287, 120
      %v1594 = vpop.permute.xlu0 %1593
      %v1595 = vsel %vm793, %v1588, %v1590
      %v1596 = vsel %vm793, %v1592, %v1594
      %1599 = vrot.lane.b32.xlu0 %v1293, 112
      %v1600 = vpop.permute.xlu0 %1599
      %1601 = vrot.lane.b32.xlu0 %v1294, 112
      %v1602 = vpop.permute.xlu0 %1601
      %1603 = vrot.lane.b32.xlu0 %v1285, 112
      %v1604 = vpop.permute.xlu0 %1603
      %1605 = vrot.lane.b32.xlu0 %v1287, 112
      %v1606 = vpop.permute.xlu0 %1605
      %v1607 = vsel %vm806, %v1600, %v1602
      %v1608 = vsel %vm806, %v1604, %v1606
      %v1612 = vrot.slane %v1293, 1
      %v1613 = vrot.slane %v1285, 1
      %v1614 = vsel %vm468, %v1612, %v1613
      %v1615 = vrot.slane %v1295, 1
      %v1616 = vsel %vm468, %v1613, %v1615
      %v1620 = vrot.slane %v1294, 1
      %v1621 = vrot.slane %v1287, 1
      %v1622 = vsel %vm468, %v1620, %v1621
      %v1623 = vrot.slane %v1296, 1
      %v1624 = vsel %vm468, %v1621, %v1623
      %1625 = vrot.lane.b32.xlu0 %v1614, 120
      %v1626 = vpop.permute.xlu0 %1625
      %1627 = vrot.lane.b32.xlu0 %v1622, 120
      %v1628 = vpop.permute.xlu0 %1627
      %1629 = vrot.lane.b32.xlu0 %v1616, 120
      %v1630 = vpop.permute.xlu0 %1629
      %1631 = vrot.lane.b32.xlu0 %v1624, 120
      %v1632 = vpop.permute.xlu0 %1631
      %v1633 = vsel %vm793, %v1626, %v1628
      %v1634 = vsel %vm793, %v1630, %v1632
      %1637 = vrot.lane.b32.xlu0 %v1614, 112
      %v1638 = vpop.permute.xlu0 %1637
      %1639 = vrot.lane.b32.xlu0 %v1622, 112
      %v1640 = vpop.permute.xlu0 %1639
      %1641 = vrot.lane.b32.xlu0 %v1616, 112
      %v1642 = vpop.permute.xlu0 %1641
      %1643 = vrot.lane.b32.xlu0 %v1624, 112
      %v1644 = vpop.permute.xlu0 %1643
      %v1645 = vsel %vm806, %v1638, %v1640
      %v1646 = vsel %vm806, %v1642, %v1644
      %v1649 = vrot.slane %v1293, 2
      %v1650 = vrot.slane %v1285, 2
      %v1651 = vsel %vm492, %v1649, %v1650
      %v1652 = vrot.slane %v1295, 2
      %v1653 = vsel %vm492, %v1650, %v1652
      %v1656 = vrot.slane %v1294, 2
      %v1657 = vrot.slane %v1287, 2
      %v1658 = vsel %vm492, %v1656, %v1657
      %v1659 = vrot.slane %v1296, 2
      %v1660 = vsel %vm492, %v1657, %v1659
      %1661 = vrot.lane.b32.xlu0 %v1651, 120
      %v1662 = vpop.permute.xlu0 %1661
      %1663 = vrot.lane.b32.xlu0 %v1658, 120
      %v1664 = vpop.permute.xlu0 %1663
      %1665 = vrot.lane.b32.xlu0 %v1653, 120
      %v1666 = vpop.permute.xlu0 %1665
      %1667 = vrot.lane.b32.xlu0 %v1660, 120
      %v1668 = vpop.permute.xlu0 %1667
      %v1669 = vsel %vm793, %v1662, %v1664
      %v1670 = vsel %vm793, %v1666, %v1668
      %1673 = vrot.lane.b32.xlu0 %v1651, 112
      %v1674 = vpop.permute.xlu0 %1673
      %1675 = vrot.lane.b32.xlu0 %v1658, 112
      %v1676 = vpop.permute.xlu0 %1675
      %1677 = vrot.lane.b32.xlu0 %v1653, 112
      %v1678 = vpop.permute.xlu0 %1677
      %1679 = vrot.lane.b32.xlu0 %v1660, 112
      %v1680 = vpop.permute.xlu0 %1679
      %v1681 = vsel %vm806, %v1674, %v1676
      %v1682 = vsel %vm806, %v1678, %v1680
      %1685 = vmatprep.subr.mxu0 0.0
      %1686 = vmatpush1.msra.mxu0 %v1312
      %1687 = vmatprep.subr.mxu0 0.0
      %1688 = vmatpush1.msra.mxu0 %v1311
      %1689 = vmatprep.subr.mxu0 0.0
      %1690 = vmatpush1.msra.mxu0 %v1310
      %1691 = vmatprep.subr.mxu0 0.0
      %1692 = vmatpush1.msra.mxu0 %v1309
      %1693 = vmatprep.subr.mxu0 0.0
      %1694 = vmatpush1.msra.mxu0 %v1308
      %1695 = vmatprep.subr.mxu0 0.0
      %1696 = vmatpush1.msra.mxu0 %v1307
      %1697 = vmatprep.subr.mxu0 0.0
      %1698 = vmatpush1.msra.mxu0 %v1306
      %1699 = vmatprep.subr.mxu0 0.0
      %1700 = vmatpush1.msra.mxu0 %v1305
      %1701 = vmatprep.subr.mxu0 0.0
      %1702 = vmatpush1.msra.mxu0 %v1304
      %1703 = vmatprep.subr.mxu0 0.0
      %1704 = vmatpush1.msra.mxu0 %v1303
      %1705 = vmatprep.subr.mxu0 0.0
      %1706 = vmatpush1.msra.mxu0 %v1302
      %1707 = vmatprep.subr.mxu0 0.0
      %1708 = vmatpush1.msra.mxu0 %v1301
      %1709 = vmatprep.subr.mxu0 0.0
      %1710 = vmatpush1.msra.mxu0 %v1300
      %1711 = vmatprep.subr.mxu0 0.0
      %1712 = vmatpush1.msra.mxu0 %v1299
      %1713 = vmatprep.subr.mxu0 0.0
      %1714 = vmatpush1.msra.mxu0 %v1298
      %1715 = vmatprep.subr.mxu0 0.0
      %1716 = vmatpush1.msra.mxu0 %v1297
      %1717 = vmatprep.subr.mxu0 0.0
      %1718 = vmatpush2.msra.mxu0 %v1328
      %1719 = vmatprep.subr.mxu0 0.0
      %1720 = vmatpush2.msra.mxu0 %v1327
      %1721 = vmatprep.subr.mxu0 0.0
      %1722 = vmatpush2.msra.mxu0 %v1326
      %1723 = vmatprep.subr.mxu0 0.0
      %1724 = vmatpush2.msra.mxu0 %v1325
      %1725 = vmatprep.subr.mxu0 0.0
      %1726 = vmatpush2.msra.mxu0 %v1324
      %1727 = vmatprep.subr.mxu0 0.0
      %1728 = vmatpush2.msra.mxu0 %v1323
      %1729 = vmatprep.subr.mxu0 0.0
      %1730 = vmatpush2.msra.mxu0 %v1322
      %1731 = vmatprep.subr.mxu0 0.0
      %1732 = vmatpush2.msra.mxu0 %v1321
      %1733 = vmatprep.subr.mxu0 0.0
      %1734 = vmatpush2.msra.mxu0 %v1320
      %1735 = vmatprep.subr.mxu0 0.0
      %1736 = vmatpush2.msra.mxu0 %v1319
      %1737 = vmatprep.subr.mxu0 0.0
      %1738 = vmatpush2.msra.mxu0 %v1318
      %1739 = vmatprep.subr.mxu0 0.0
      %1740 = vmatpush2.msra.mxu0 %v1317
      %1741 = vmatprep.subr.mxu0 0.0
      %1742 = vmatpush2.msra.mxu0 %v1316
      %1743 = vmatprep.subr.mxu0 0.0
      %1744 = vmatpush2.msra.mxu0 %v1315
      %1745 = vmatprep.subr.mxu0 0.0
      %1746 = vmatpush2.msra.mxu0 %v1314
      %1747 = vmatprep.subr.mxu0 0.0
      %1748 = vmatpush2.msra.mxu0 %v1313
      %1749 = vmatprep.mubr.f32.mxu0 %v1595
      %1750 = vmatmul.mubr.f32.gmra.mxu0 %v1293
      %v1751 = vpop.f32.mrf.mxu0
      %v1752 = vadd.f32 0.0, %v1751
      %v1753 = vpop.f32.mrf.mxu0
      %1754 = vmatprep.mubr.f32.mxu0 %v1596
      %1755 = vmatmul.mubr.f32.gmra.mxu0 %v1285
      %v1756 = vpop.f32.mrf.mxu0
      %v1757 = vadd.f32 0.0, %v1756
      %v1758 = vpop.f32.mrf.mxu0
      %1759 = vdwg.mxu0
      %1760 = vmatprep.subr.mxu0 0.0
      %1761 = vmatpush1.msra.mxu0 %v1344
      %1762 = vmatprep.subr.mxu0 0.0
      %1763 = vmatpush1.msra.mxu0 %v1343
      %1764 = vmatprep.subr.mxu0 0.0
      %1765 = vmatpush1.msra.mxu0 %v1342
      %1766 = vmatprep.subr.mxu0 0.0
      %1767 = vmatpush1.msra.mxu0 %v1341
      %1768 = vmatprep.subr.mxu0 0.0
      %1769 = vmatpush1.msra.mxu0 %v1340
      %1770 = vmatprep.subr.mxu0 0.0
      %1771 = vmatpush1.msra.mxu0 %v1339
      %1772 = vmatprep.subr.mxu0 0.0
      %1773 = vmatpush1.msra.mxu0 %v1338
      %1774 = vmatprep.subr.mxu0 0.0
      %1775 = vmatpush1.msra.mxu0 %v1337
      %1776 = vmatprep.subr.mxu0 0.0
      %1777 = vmatpush1.msra.mxu0 %v1336
      %1778 = vmatprep.subr.mxu0 0.0
      %1779 = vmatpush1.msra.mxu0 %v1335
      %1780 = vmatprep.subr.mxu0 0.0
      %1781 = vmatpush1.msra.mxu0 %v1334
      %1782 = vmatprep.subr.mxu0 0.0
      %1783 = vmatpush1.msra.mxu0 %v1333
      %1784 = vmatprep.subr.mxu0 0.0
      %1785 = vmatpush1.msra.mxu0 %v1332
      %1786 = vmatprep.subr.mxu0 0.0
      %1787 = vmatpush1.msra.mxu0 %v1331
      %1788 = vmatprep.subr.mxu0 0.0
      %1789 = vmatpush1.msra.mxu0 %v1330
      %1790 = vmatprep.subr.mxu0 0.0
      %1791 = vmatpush1.msra.mxu0 %v1329
      %1792 = vmatprep.subr.mxu0 0.0
      %1793 = vmatpush2.msra.mxu0 %v1360
      %1794 = vmatprep.subr.mxu0 0.0
      %1795 = vmatpush2.msra.mxu0 %v1359
      %1796 = vmatprep.subr.mxu0 0.0
      %1797 = vmatpush2.msra.mxu0 %v1358
      %1798 = vmatprep.subr.mxu0 0.0
      %1799 = vmatpush2.msra.mxu0 %v1357
      %1800 = vmatprep.subr.mxu0 0.0
      %1801 = vmatpush2.msra.mxu0 %v1356
      %1802 = vmatprep.subr.mxu0 0.0
      %1803 = vmatpush2.msra.mxu0 %v1355
      %1804 = vmatprep.subr.mxu0 0.0
      %1805 = vmatpush2.msra.mxu0 %v1354
      %1806 = vmatprep.subr.mxu0 0.0
      %1807 = vmatpush2.msra.mxu0 %v1353
      %1808 = vmatprep.subr.mxu0 0.0
      %1809 = vmatpush2.msra.mxu0 %v1352
      %1810 = vmatprep.subr.mxu0 0.0
      %1811 = vmatpush2.msra.mxu0 %v1351
      %1812 = vmatprep.subr.mxu0 0.0
      %1813 = vmatpush2.msra.mxu0 %v1350
      %1814 = vmatprep.subr.mxu0 0.0
      %1815 = vmatpush2.msra.mxu0 %v1349
      %1816 = vmatprep.subr.mxu0 0.0
      %1817 = vmatpush2.msra.mxu0 %v1348
      %1818 = vmatprep.subr.mxu0 0.0
      %1819 = vmatpush2.msra.mxu0 %v1347
      %1820 = vmatprep.subr.mxu0 0.0
      %1821 = vmatpush2.msra.mxu0 %v1346
      %1822 = vmatprep.subr.mxu0 0.0
      %1823 = vmatpush2.msra.mxu0 %v1345
      %1824 = vmatprep.mubr.f32.mxu0 %v1614
      %1825 = vmatmul.mubr.f32.gmra.mxu0 %v1607
      %v1826 = vpop.f32.mrf.mxu0
      %v1827 = vadd.f32 %v1752, %v1826
      %v1828 = vpop.f32.mrf.mxu0
      %1829 = vmatprep.mubr.f32.mxu0 %v1616
      %1830 = vmatmul.mubr.f32.gmra.mxu0 %v1608
      %v1831 = vpop.f32.mrf.mxu0
      %v1832 = vadd.f32 %v1757, %v1831
      %v1833 = vpop.f32.mrf.mxu0
      %1834 = vdwg.mxu0
      %1835 = vmatprep.subr.mxu0 0.0
      %1836 = vmatpush1.msra.mxu0 %v1376
      %1837 = vmatprep.subr.mxu0 0.0
      %1838 = vmatpush1.msra.mxu0 %v1375
      %1839 = vmatprep.subr.mxu0 0.0
      %1840 = vmatpush1.msra.mxu0 %v1374
      %1841 = vmatprep.subr.mxu0 0.0
      %1842 = vmatpush1.msra.mxu0 %v1373
      %1843 = vmatprep.subr.mxu0 0.0
      %1844 = vmatpush1.msra.mxu0 %v1372
      %1845 = vmatprep.subr.mxu0 0.0
      %1846 = vmatpush1.msra.mxu0 %v1371
      %1847 = vmatprep.subr.mxu0 0.0
      %1848 = vmatpush1.msra.mxu0 %v1370
      %1849 = vmatprep.subr.mxu0 0.0
      %1850 = vmatpush1.msra.mxu0 %v1369
      %1851 = vmatprep.subr.mxu0 0.0
      %1852 = vmatpush1.msra.mxu0 %v1368
      %1853 = vmatprep.subr.mxu0 0.0
      %1854 = vmatpush1.msra.mxu0 %v1367
      %1855 = vmatprep.subr.mxu0 0.0
      %1856 = vmatpush1.msra.mxu0 %v1366
      %1857 = vmatprep.subr.mxu0 0.0
      %1858 = vmatpush1.msra.mxu0 %v1365
      %1859 = vmatprep.subr.mxu0 0.0
      %1860 = vmatpush1.msra.mxu0 %v1364
      %1861 = vmatprep.subr.mxu0 0.0
      %1862 = vmatpush1.msra.mxu0 %v1363
      %1863 = vmatprep.subr.mxu0 0.0
      %1864 = vmatpush1.msra.mxu0 %v1362
      %1865 = vmatprep.subr.mxu0 0.0
      %1866 = vmatpush1.msra.mxu0 %v1361
      %1867 = vmatprep.subr.mxu0 0.0
      %1868 = vmatpush2.msra.mxu0 %v1392
      %1869 = vmatprep.subr.mxu0 0.0
      %1870 = vmatpush2.msra.mxu0 %v1391
      %1871 = vmatprep.subr.mxu0 0.0
      %1872 = vmatpush2.msra.mxu0 %v1390
      %1873 = vmatprep.subr.mxu0 0.0
      %1874 = vmatpush2.msra.mxu0 %v1389
      %1875 = vmatprep.subr.mxu0 0.0
      %1876 = vmatpush2.msra.mxu0 %v1388
      %1877 = vmatprep.subr.mxu0 0.0
      %1878 = vmatpush2.msra.mxu0 %v1387
      %1879 = vmatprep.subr.mxu0 0.0
      %1880 = vmatpush2.msra.mxu0 %v1386
      %1881 = vmatprep.subr.mxu0 0.0
      %1882 = vmatpush2.msra.mxu0 %v1385
      %1883 = vmatprep.subr.mxu0 0.0
      %1884 = vmatpush2.msra.mxu0 %v1384
      %1885 = vmatprep.subr.mxu0 0.0
      %1886 = vmatpush2.msra.mxu0 %v1383
      %1887 = vmatprep.subr.mxu0 0.0
      %1888 = vmatpush2.msra.mxu0 %v1382
      %1889 = vmatprep.subr.mxu0 0.0
      %1890 = vmatpush2.msra.mxu0 %v1381
      %1891 = vmatprep.subr.mxu0 0.0
      %1892 = vmatpush2.msra.mxu0 %v1380
      %1893 = vmatprep.subr.mxu0 0.0
      %1894 = vmatpush2.msra.mxu0 %v1379
      %1895 = vmatprep.subr.mxu0 0.0
      %1896 = vmatpush2.msra.mxu0 %v1378
      %1897 = vmatprep.subr.mxu0 0.0
      %1898 = vmatpush2.msra.mxu0 %v1377
      %1899 = vmatprep.mubr.f32.mxu0 %v1645
      %1900 = vmatmul.mubr.f32.gmra.mxu0 %v1633
      %v1901 = vpop.f32.mrf.mxu0
      %v1902 = vadd.f32 %v1827, %v1901
      %v1903 = vpop.f32.mrf.mxu0
      %1904 = vmatprep.mubr.f32.mxu0 %v1646
      %1905 = vmatmul.mubr.f32.gmra.mxu0 %v1634
      %v1906 = vpop.f32.mrf.mxu0
      %v1907 = vadd.f32 %v1832, %v1906
      %v1908 = vpop.f32.mrf.mxu0
      %1909 = vdwg.mxu0
      %1910 = vmatprep.subr.mxu0 0.0
      %1911 = vmatpush1.msra.mxu0 %v1408
      %1912 = vmatprep.subr.mxu0 0.0
      %1913 = vmatpush1.msra.mxu0 %v1407
      %1914 = vmatprep.subr.mxu0 0.0
      %1915 = vmatpush1.msra.mxu0 %v1406
      %1916 = vmatprep.subr.mxu0 0.0
      %1917 = vmatpush1.msra.mxu0 %v1405
      %1918 = vmatprep.subr.mxu0 0.0
      %1919 = vmatpush1.msra.mxu0 %v1404
      %1920 = vmatprep.subr.mxu0 0.0
      %1921 = vmatpush1.msra.mxu0 %v1403
      %1922 = vmatprep.subr.mxu0 0.0
      %1923 = vmatpush1.msra.mxu0 %v1402
      %1924 = vmatprep.subr.mxu0 0.0
      %1925 = vmatpush1.msra.mxu0 %v1401
      %1926 = vmatprep.subr.mxu0 0.0
      %1927 = vmatpush1.msra.mxu0 %v1400
      %1928 = vmatprep.subr.mxu0 0.0
      %1929 = vmatpush1.msra.mxu0 %v1399
      %1930 = vmatprep.subr.mxu0 0.0
      %1931 = vmatpush1.msra.mxu0 %v1398
      %1932 = vmatprep.subr.mxu0 0.0
      %1933 = vmatpush1.msra.mxu0 %v1397
      %1934 = vmatprep.subr.mxu0 0.0
      %1935 = vmatpush1.msra.mxu0 %v1396
      %1936 = vmatprep.subr.mxu0 0.0
      %1937 = vmatpush1.msra.mxu0 %v1395
      %1938 = vmatprep.subr.mxu0 0.0
      %1939 = vmatpush1.msra.mxu0 %v1394
      %1940 = vmatprep.subr.mxu0 0.0
      %1941 = vmatpush1.msra.mxu0 %v1393
      %1942 = vmatprep.subr.mxu0 0.0
      %1943 = vmatpush2.msra.mxu0 %v1424
      %1944 = vmatprep.subr.mxu0 0.0
      %1945 = vmatpush2.msra.mxu0 %v1423
      %1946 = vmatprep.subr.mxu0 0.0
      %1947 = vmatpush2.msra.mxu0 %v1422
      %1948 = vmatprep.subr.mxu0 0.0
      %1949 = vmatpush2.msra.mxu0 %v1421
      %1950 = vmatprep.subr.mxu0 0.0
      %1951 = vmatpush2.msra.mxu0 %v1420
      %1952 = vmatprep.subr.mxu0 0.0
      %1953 = vmatpush2.msra.mxu0 %v1419
      %1954 = vmatprep.subr.mxu0 0.0
      %1955 = vmatpush2.msra.mxu0 %v1418
      %1956 = vmatprep.subr.mxu0 0.0
      %1957 = vmatpush2.msra.mxu0 %v1417
      %1958 = vmatprep.subr.mxu0 0.0
      %1959 = vmatpush2.msra.mxu0 %v1416
      %1960 = vmatprep.subr.mxu0 0.0
      %1961 = vmatpush2.msra.mxu0 %v1415
      %1962 = vmatprep.subr.mxu0 0.0
      %1963 = vmatpush2.msra.mxu0 %v1414
      %1964 = vmatprep.subr.mxu0 0.0
      %1965 = vmatpush2.msra.mxu0 %v1413
      %1966 = vmatprep.subr.mxu0 0.0
      %1967 = vmatpush2.msra.mxu0 %v1412
      %1968 = vmatprep.subr.mxu0 0.0
      %1969 = vmatpush2.msra.mxu0 %v1411
      %1970 = vmatprep.subr.mxu0 0.0
      %1971 = vmatpush2.msra.mxu0 %v1410
      %1972 = vmatprep.subr.mxu0 0.0
      %1973 = vmatpush2.msra.mxu0 %v1409
      %1974 = vmatprep.mubr.f32.mxu0 %v1669
      %1975 = vmatmul.mubr.f32.gmra.mxu0 %v1651
      %v1976 = vpop.f32.mrf.mxu0
      %v1977 = vadd.f32 %v1902, %v1976
      %v1978 = vpop.f32.mrf.mxu0
      %1979 = vmatprep.mubr.f32.mxu0 %v1670
      %1980 = vmatmul.mubr.f32.gmra.mxu0 %v1653
      %v1981 = vpop.f32.mrf.mxu0
      %v1982 = vadd.f32 %v1907, %v1981
      %v1983 = vpop.f32.mrf.mxu0
      %1984 = vdwg.mxu0
      %1985 = vmatprep.subr.mxu0 0.0
      %1986 = vmatpush1.msra.mxu0 %v1440
      %1987 = vmatprep.subr.mxu0 0.0
      %1988 = vmatpush1.msra.mxu0 %v1439
      %1989 = vmatprep.subr.mxu0 0.0
      %1990 = vmatpush1.msra.mxu0 %v1438
      %1991 = vmatprep.subr.mxu0 0.0
      %1992 = vmatpush1.msra.mxu0 %v1437
      %1993 = vmatprep.subr.mxu0 0.0
      %1994 = vmatpush1.msra.mxu0 %v1436
      %1995 = vmatprep.subr.mxu0 0.0
      %1996 = vmatpush1.msra.mxu0 %v1435
      %1997 = vmatprep.subr.mxu0 0.0
      %1998 = vmatpush1.msra.mxu0 %v1434
      %1999 = vmatprep.subr.mxu0 0.0
      %2000 = vmatpush1.msra.mxu0 %v1433
      %2001 = vmatprep.subr.mxu0 0.0
      %2002 = vmatpush1.msra.mxu0 %v1432
      %2003 = vmatprep.subr.mxu0 0.0
      %2004 = vmatpush1.msra.mxu0 %v1431
      %2005 = vmatprep.subr.mxu0 0.0
      %2006 = vmatpush1.msra.mxu0 %v1430
      %2007 = vmatprep.subr.mxu0 0.0
      %2008 = vmatpush1.msra.mxu0 %v1429
      %2009 = vmatprep.subr.mxu0 0.0
      %2010 = vmatpush1.msra.mxu0 %v1428
      %2011 = vmatprep.subr.mxu0 0.0
      %2012 = vmatpush1.msra.mxu0 %v1427
      %2013 = vmatprep.subr.mxu0 0.0
      %2014 = vmatpush1.msra.mxu0 %v1426
      %2015 = vmatprep.subr.mxu0 0.0
      %2016 = vmatpush1.msra.mxu0 %v1425
      %2017 = vmatprep.subr.mxu0 0.0
      %2018 = vmatpush2.msra.mxu0 0.0
      %2019 = vmatprep.subr.mxu0 0.0
      %2020 = vmatpush2.msra.mxu0 0.0
      %2021 = vmatprep.subr.mxu0 0.0
      %2022 = vmatpush2.msra.mxu0 0.0
      %2023 = vmatprep.subr.mxu0 0.0
      %2024 = vmatpush2.msra.mxu0 0.0
      %2025 = vmatprep.subr.mxu0 0.0
      %2026 = vmatpush2.msra.mxu0 0.0
      %2027 = vmatprep.subr.mxu0 0.0
      %2028 = vmatpush2.msra.mxu0 0.0
      %2029 = vmatprep.subr.mxu0 0.0
      %2030 = vmatpush2.msra.mxu0 0.0
      %2031 = vmatprep.subr.mxu0 0.0
      %2032 = vmatpush2.msra.mxu0 0.0
      %2033 = vmatprep.subr.mxu0 0.0
      %2034 = vmatpush2.msra.mxu0 0.0
      %2035 = vmatprep.subr.mxu0 0.0
      %2036 = vmatpush2.msra.mxu0 0.0
      %2037 = vmatprep.subr.mxu0 0.0
      %2038 = vmatpush2.msra.mxu0 0.0
      %2039 = vmatprep.subr.mxu0 0.0
      %2040 = vmatpush2.msra.mxu0 0.0
      %2041 = vmatprep.subr.mxu0 0.0
      %2042 = vmatpush2.msra.mxu0 0.0
      %2043 = vmatprep.subr.mxu0 0.0
      %2044 = vmatpush2.msra.mxu0 0.0
      %2045 = vmatprep.subr.mxu0 0.0
      %2046 = vmatpush2.msra.mxu0 0.0
      %2047 = vmatprep.subr.mxu0 0.0
      %2048 = vmatpush2.msra.mxu0 0.0
      %2049 = vmatprep.mubr.f32.mxu0 0.0
      %2050 = vmatmul.mubr.f32.gmra.mxu0 %v1681
      %v2051 = vpop.f32.mrf.mxu0
      %v2052 = vadd.f32 %v1977, %v2051
      %v2053 = vpop.f32.mrf.mxu0
      %2054 = vmatprep.mubr.f32.mxu0 0.0
      %2055 = vmatmul.mubr.f32.gmra.mxu0 %v1682
      %v2056 = vpop.f32.mrf.mxu0
      %v2057 = vadd.f32 %v1982, %v2056
      %v2058 = vpop.f32.mrf.mxu0
      %2059 = vdwg.mxu0
      %v2060 = vmax.f32 %v2052, 0.0
      %v2061 = vmax.f32 %v2057, 0.0
      %2064 = vrot.lane.b32.xlu0 %v2060, 8
      %v2065 = vpop.permute.xlu0 %2064
      %2066 = vrot.lane.b32.xlu0 %v2061, 8
      %v2067 = vpop.permute.xlu0 %2066
      %v2070 = vsel %vm758, 0.0, %v2065
      %v2071 = vsel %vm758, 0.0, %v2067
      %v2072 = vsel %vm758, %v2065, 0.0
      %v2073 = vsel %vm758, %v2067, 0.0
      %v2078 = vrot.slane %v2070, 7
      %v2079 = vrot.slane %v2072, 7
      %v2080 = vrot.slane %v2071, 7
      %v2081 = vsel %vm767, %v2078, %v2080
      %v2082 = vrot.slane %v2073, 7
      %v2083 = vsel %vm767, %v2079, %v2082
      %v2089 = vsel %vm767, 0.0, %v2078
      %v2090 = vsel %vm767, 0.0, %v2079
      %v2091 = vsel %vm767, %v2080, 0.0
      %v2092 = vsel %vm767, %v2082, 0.0
      %2095 = vrot.lane.b32.xlu0 %v2089, 120
      %v2096 = vpop.permute.xlu0 %2095
      %2097 = vrot.lane.b32.xlu0 %v2090, 120
      %v2098 = vpop.permute.xlu0 %2097
      %2099 = vrot.lane.b32.xlu0 %v2081, 120
      %v2100 = vpop.permute.xlu0 %2099
      %2101 = vrot.lane.b32.xlu0 %v2083, 120
      %v2102 = vpop.permute.xlu0 %2101
      %v2103 = vsel %vm793, %v2096, %v2098
      %v2104 = vsel %vm793, %v2100, %v2102
      %2107 = vrot.lane.b32.xlu0 %v2089, 112
      %v2108 = vpop.permute.xlu0 %2107
      %2109 = vrot.lane.b32.xlu0 %v2090, 112
      %v2110 = vpop.permute.xlu0 %2109
      %2111 = vrot.lane.b32.xlu0 %v2081, 112
      %v2112 = vpop.permute.xlu0 %2111
      %2113 = vrot.lane.b32.xlu0 %v2083, 112
      %v2114 = vpop.permute.xlu0 %2113
      %v2115 = vsel %vm806, %v2108, %v2110
      %v2116 = vsel %vm806, %v2112, %v2114
      %v2120 = vrot.slane %v2089, 1
      %v2121 = vrot.slane %v2081, 1
      %v2122 = vsel %vm468, %v2120, %v2121
      %v2123 = vrot.slane %v2091, 1
      %v2124 = vsel %vm468, %v2121, %v2123
      %v2128 = vrot.slane %v2090, 1
      %v2129 = vrot.slane %v2083, 1
      %v2130 = vsel %vm468, %v2128, %v2129
      %v2131 = vrot.slane %v2092, 1
      %v2132 = vsel %vm468, %v2129, %v2131
      %2133 = vrot.lane.b32.xlu0 %v2122, 120
      %v2134 = vpop.permute.xlu0 %2133
      %2135 = vrot.lane.b32.xlu0 %v2130, 120
      %v2136 = vpop.permute.xlu0 %2135
      %2137 = vrot.lane.b32.xlu0 %v2124, 120
      %v2138 = vpop.permute.xlu0 %2137
      %2139 = vrot.lane.b32.xlu0 %v2132, 120
      %v2140 = vpop.permute.xlu0 %2139
      %v2141 = vsel %vm793, %v2134, %v2136
      %v2142 = vsel %vm793, %v2138, %v2140
      %2145 = vrot.lane.b32.xlu0 %v2122, 112
      %v2146 = vpop.permute.xlu0 %2145
      %2147 = vrot.lane.b32.xlu0 %v2130, 112
      %v2148 = vpop.permute.xlu0 %2147
      %2149 = vrot.lane.b32.xlu0 %v2124, 112
      %v2150 = vpop.permute.xlu0 %2149
      %2151 = vrot.lane.b32.xlu0 %v2132, 112
      %v2152 = vpop.permute.xlu0 %2151
      %v2153 = vsel %vm806, %v2146, %v2148
      %v2154 = vsel %vm806, %v2150, %v2152
      %v2157 = vrot.slane %v2089, 2
      %v2158 = vrot.slane %v2081, 2
      %v2159 = vsel %vm492, %v2157, %v2158
      %v2160 = vrot.slane %v2091, 2
      %v2161 = vsel %vm492, %v2158, %v2160
      %v2164 = vrot.slane %v2090, 2
      %v2165 = vrot.slane %v2083, 2
      %v2166 = vsel %vm492, %v2164, %v2165
      %v2167 = vrot.slane %v2092, 2
      %v2168 = vsel %vm492, %v2165, %v2167
      %2169 = vrot.lane.b32.xlu0 %v2159, 120
      %v2170 = vpop.permute.xlu0 %2169
      %2171 = vrot.lane.b32.xlu0 %v2166, 120
      %v2172 = vpop.permute.xlu0 %2171
      %2173 = vrot.lane.b32.xlu0 %v2161, 120
      %v2174 = vpop.permute.xlu0 %2173
      %2175 = vrot.lane.b32.xlu0 %v2168, 120
      %v2176 = vpop.permute.xlu0 %2175
      %v2177 = vsel %vm793, %v2170, %v2172
      %v2178 = vsel %vm793, %v2174, %v2176
      %2181 = vrot.lane.b32.xlu0 %v2159, 112
      %v2182 = vpop.permute.xlu0 %2181
      %2183 = vrot.lane.b32.xlu0 %v2166, 112
      %v2184 = vpop.permute.xlu0 %2183
      %2185 = vrot.lane.b32.xlu0 %v2161, 112
      %v2186 = vpop.permute.xlu0 %2185
      %2187 = vrot.lane.b32.xlu0 %v2168, 112
      %v2188 = vpop.permute.xlu0 %2187
      %v2189 = vsel %vm806, %v2182, %v2184
      %v2190 = vsel %vm806, %v2186, %v2188
      %2193 = vmatprep.subr.mxu0 0.0
      %2194 = vmatpush1.msra.mxu0 %v1456
      %2195 = vmatprep.subr.mxu0 0.0
      %2196 = vmatpush1.msra.mxu0 %v1455
      %2197 = vmatprep.subr.mxu0 0.0
      %2198 = vmatpush1.msra.mxu0 %v1454
      %2199 = vmatprep.subr.mxu0 0.0
      %2200 = vmatpush1.msra.mxu0 %v1453
      %2201 = vmatprep.subr.mxu0 0.0
      %2202 = vmatpush1.msra.mxu0 %v1452
      %2203 = vmatprep.subr.mxu0 0.0
      %2204 = vmatpush1.msra.mxu0 %v1451
      %2205 = vmatprep.subr.mxu0 0.0
      %2206 = vmatpush1.msra.mxu0 %v1450
      %2207 = vmatprep.subr.mxu0 0.0
      %2208 = vmatpush1.msra.mxu0 %v1449
      %2209 = vmatprep.subr.mxu0 0.0
      %2210 = vmatpush1.msra.mxu0 %v1448
      %2211 = vmatprep.subr.mxu0 0.0
      %2212 = vmatpush1.msra.mxu0 %v1447
      %2213 = vmatprep.subr.mxu0 0.0
      %2214 = vmatpush1.msra.mxu0 %v1446
      %2215 = vmatprep.subr.mxu0 0.0
      %2216 = vmatpush1.msra.mxu0 %v1445
      %2217 = vmatprep.subr.mxu0 0.0
      %2218 = vmatpush1.msra.mxu0 %v1444
      %2219 = vmatprep.subr.mxu0 0.0
      %2220 = vmatpush1.msra.mxu0 %v1443
      %2221 = vmatprep.subr.mxu0 0.0
      %2222 = vmatpush1.msra.mxu0 %v1442
      %2223 = vmatprep.subr.mxu0 0.0
      %2224 = vmatpush1.msra.mxu0 %v1441
      %2225 = vmatprep.subr.mxu0 0.0
      %2226 = vmatpush2.msra.mxu0 %v1472
      %2227 = vmatprep.subr.mxu0 0.0
      %2228 = vmatpush2.msra.mxu0 %v1471
      %2229 = vmatprep.subr.mxu0 0.0
      %2230 = vmatpush2.msra.mxu0 %v1470
      %2231 = vmatprep.subr.mxu0 0.0
      %2232 = vmatpush2.msra.mxu0 %v1469
      %2233 = vmatprep.subr.mxu0 0.0
      %2234 = vmatpush2.msra.mxu0 %v1468
      %2235 = vmatprep.subr.mxu0 0.0
      %2236 = vmatpush2.msra.mxu0 %v1467
      %2237 = vmatprep.subr.mxu0 0.0
      %2238 = vmatpush2.msra.mxu0 %v1466
      %2239 = vmatprep.subr.mxu0 0.0
      %2240 = vmatpush2.msra.mxu0 %v1465
      %2241 = vmatprep.subr.mxu0 0.0
      %2242 = vmatpush2.msra.mxu0 %v1464
      %2243 = vmatprep.subr.mxu0 0.0
      %2244 = vmatpush2.msra.mxu0 %v1463
      %2245 = vmatprep.subr.mxu0 0.0
      %2246 = vmatpush2.msra.mxu0 %v1462
      %2247 = vmatprep.subr.mxu0 0.0
      %2248 = vmatpush2.msra.mxu0 %v1461
      %2249 = vmatprep.subr.mxu0 0.0
      %2250 = vmatpush2.msra.mxu0 %v1460
      %2251 = vmatprep.subr.mxu0 0.0
      %2252 = vmatpush2.msra.mxu0 %v1459
      %2253 = vmatprep.subr.mxu0 0.0
      %2254 = vmatpush2.msra.mxu0 %v1458
      %2255 = vmatprep.subr.mxu0 0.0
      %2256 = vmatpush2.msra.mxu0 %v1457
      %2257 = vmatprep.mubr.f32.mxu0 %v2103
      %2258 = vmatmul.mubr.f32.gmra.mxu0 %v2089
      %v2259 = vpop.f32.mrf.mxu0
      %v2260 = vadd.f32 %v1264, %v2259
      %v2261 = vpop.f32.mrf.mxu0
      %2262 = vmatprep.mubr.f32.mxu0 %v2104
      %2263 = vmatmul.mubr.f32.gmra.mxu0 %v2081
      %v2264 = vpop.f32.mrf.mxu0
      %v2265 = vadd.f32 %v1265, %v2264
      %v2266 = vpop.f32.mrf.mxu0
      %2267 = vdwg.mxu0
      %2268 = vmatprep.subr.mxu0 0.0
      %2269 = vmatpush1.msra.mxu0 %v1488
      %2270 = vmatprep.subr.mxu0 0.0
      %2271 = vmatpush1.msra.mxu0 %v1487
      %2272 = vmatprep.subr.mxu0 0.0
      %2273 = vmatpush1.msra.mxu0 %v1486
      %2274 = vmatprep.subr.mxu0 0.0
      %2275 = vmatpush1.msra.mxu0 %v1485
      %2276 = vmatprep.subr.mxu0 0.0
      %2277 = vmatpush1.msra.mxu0 %v1484
      %2278 = vmatprep.subr.mxu0 0.0
      %2279 = vmatpush1.msra.mxu0 %v1483
      %2280 = vmatprep.subr.mxu0 0.0
      %2281 = vmatpush1.msra.mxu0 %v1482
      %2282 = vmatprep.subr.mxu0 0.0
      %2283 = vmatpush1.msra.mxu0 %v1481
      %2284 = vmatprep.subr.mxu0 0.0
      %2285 = vmatpush1.msra.mxu0 %v1480
      %2286 = vmatprep.subr.mxu0 0.0
      %2287 = vmatpush1.msra.mxu0 %v1479
      %2288 = vmatprep.subr.mxu0 0.0
      %2289 = vmatpush1.msra.mxu0 %v1478
      %2290 = vmatprep.subr.mxu0 0.0
      %2291 = vmatpush1.msra.mxu0 %v1477
      %2292 = vmatprep.subr.mxu0 0.0
      %2293 = vmatpush1.msra.mxu0 %v1476
      %2294 = vmatprep.subr.mxu0 0.0
      %2295 = vmatpush1.msra.mxu0 %v1475
      %2296 = vmatprep.subr.mxu0 0.0
      %2297 = vmatpush1.msra.mxu0 %v1474
      %2298 = vmatprep.subr.mxu0 0.0
      %2299 = vmatpush1.msra.mxu0 %v1473
      %2300 = vmatprep.subr.mxu0 0.0
      %2301 = vmatpush2.msra.mxu0 %v1504
      %2302 = vmatprep.subr.mxu0 0.0
      %2303 = vmatpush2.msra.mxu0 %v1503
      %2304 = vmatprep.subr.mxu0 0.0
      %2305 = vmatpush2.msra.mxu0 %v1502
      %2306 = vmatprep.subr.mxu0 0.0
      %2307 = vmatpush2.msra.mxu0 %v1501
      %2308 = vmatprep.subr.mxu0 0.0
      %2309 = vmatpush2.msra.mxu0 %v1500
      %2310 = vmatprep.subr.mxu0 0.0
      %2311 = vmatpush2.msra.mxu0 %v1499
      %2312 = vmatprep.subr.mxu0 0.0
      %2313 = vmatpush2.msra.mxu0 %v1498
      %2314 = vmatprep.subr.mxu0 0.0
      %2315 = vmatpush2.msra.mxu0 %v1497
      %2316 = vmatprep.subr.mxu0 0.0
      %2317 = vmatpush2.msra.mxu0 %v1496
      %2318 = vmatprep.subr.mxu0 0.0
      %2319 = vmatpush2.msra.mxu0 %v1495
      %2320 = vmatprep.subr.mxu0 0.0
      %2321 = vmatpush2.msra.mxu0 %v1494
      %2322 = vmatprep.subr.mxu0 0.0
      %2323 = vmatpush2.msra.mxu0 %v1493
      %2324 = vmatprep.subr.mxu0 0.0
      %2325 = vmatpush2.msra.mxu0 %v1492
      %2326 = vmatprep.subr.mxu0 0.0
      %2327 = vmatpush2.msra.mxu0 %v1491
      %2328 = vmatprep.subr.mxu0 0.0
      %2329 = vmatpush2.msra.mxu0 %v1490
      %2330 = vmatprep.subr.mxu0 0.0
      %2331 = vmatpush2.msra.mxu0 %v1489
      %2332 = vmatprep.mubr.f32.mxu0 %v2122
      %2333 = vmatmul.mubr.f32.gmra.mxu0 %v2115
      %v2334 = vpop.f32.mrf.mxu0
      %v2335 = vadd.f32 %v2260, %v2334
      %v2336 = vpop.f32.mrf.mxu0
      %2337 = vmatprep.mubr.f32.mxu0 %v2124
      %2338 = vmatmul.mubr.f32.gmra.mxu0 %v2116
      %v2339 = vpop.f32.mrf.mxu0
      %v2340 = vadd.f32 %v2265, %v2339
      %v2341 = vpop.f32.mrf.mxu0
      %2342 = vdwg.mxu0
      %2343 = vmatprep.subr.mxu0 0.0
      %2344 = vmatpush1.msra.mxu0 %v1520
      %2345 = vmatprep.subr.mxu0 0.0
      %2346 = vmatpush1.msra.mxu0 %v1519
      %2347 = vmatprep.subr.mxu0 0.0
      %2348 = vmatpush1.msra.mxu0 %v1518
      %2349 = vmatprep.subr.mxu0 0.0
      %2350 = vmatpush1.msra.mxu0 %v1517
      %2351 = vmatprep.subr.mxu0 0.0
      %2352 = vmatpush1.msra.mxu0 %v1516
      %2353 = vmatprep.subr.mxu0 0.0
      %2354 = vmatpush1.msra.mxu0 %v1515
      %2355 = vmatprep.subr.mxu0 0.0
      %2356 = vmatpush1.msra.mxu0 %v1514
      %2357 = vmatprep.subr.mxu0 0.0
      %2358 = vmatpush1.msra.mxu0 %v1513
      %2359 = vmatprep.subr.mxu0 0.0
      %2360 = vmatpush1.msra.mxu0 %v1512
      %2361 = vmatprep.subr.mxu0 0.0
      %2362 = vmatpush1.msra.mxu0 %v1511
      %2363 = vmatprep.subr.mxu0 0.0
      %2364 = vmatpush1.msra.mxu0 %v1510
      %2365 = vmatprep.subr.mxu0 0.0
      %2366 = vmatpush1.msra.mxu0 %v1509
      %2367 = vmatprep.subr.mxu0 0.0
      %2368 = vmatpush1.msra.mxu0 %v1508
      %2369 = vmatprep.subr.mxu0 0.0
      %2370 = vmatpush1.msra.mxu0 %v1507
      %2371 = vmatprep.subr.mxu0 0.0
      %2372 = vmatpush1.msra.mxu0 %v1506
      %2373 = vmatprep.subr.mxu0 0.0
      %2374 = vmatpush1.msra.mxu0 %v1505
      %2375 = vmatprep.subr.mxu0 0.0
      %2376 = vmatpush2.msra.mxu0 %v1536
      %2377 = vmatprep.subr.mxu0 0.0
      %2378 = vmatpush2.msra.mxu0 %v1535
      %2379 = vmatprep.subr.mxu0 0.0
      %2380 = vmatpush2.msra.mxu0 %v1534
      %2381 = vmatprep.subr.mxu0 0.0
      %2382 = vmatpush2.msra.mxu0 %v1533
      %2383 = vmatprep.subr.mxu0 0.0
      %2384 = vmatpush2.msra.mxu0 %v1532
      %2385 = vmatprep.subr.mxu0 0.0
      %2386 = vmatpush2.msra.mxu0 %v1531
      %2387 = vmatprep.subr.mxu0 0.0
      %2388 = vmatpush2.msra.mxu0 %v1530
      %2389 = vmatprep.subr.mxu0 0.0
      %2390 = vmatpush2.msra.mxu0 %v1529
      %2391 = vmatprep.subr.mxu0 0.0
      %2392 = vmatpush2.msra.mxu0 %v1528
      %2393 = vmatprep.subr.mxu0 0.0
      %2394 = vmatpush2.msra.mxu0 %v1527
      %2395 = vmatprep.subr.mxu0 0.0
      %2396 = vmatpush2.msra.mxu0 %v1526
      %2397 = vmatprep.subr.mxu0 0.0
      %2398 = vmatpush2.msra.mxu0 %v1525
      %2399 = vmatprep.subr.mxu0 0.0
      %2400 = vmatpush2.msra.mxu0 %v1524
      %2401 = vmatprep.subr.mxu0 0.0
      %2402 = vmatpush2.msra.mxu0 %v1523
      %2403 = vmatprep.subr.mxu0 0.0
      %2404 = vmatpush2.msra.mxu0 %v1522
      %2405 = vmatprep.subr.mxu0 0.0
      %2406 = vmatpush2.msra.mxu0 %v1521
      %2407 = vmatprep.mubr.f32.mxu0 %v2153
      %2408 = vmatmul.mubr.f32.gmra.mxu0 %v2141
      %v2409 = vpop.f32.mrf.mxu0
      %v2410 = vadd.f32 %v2335, %v2409
      %v2411 = vpop.f32.mrf.mxu0
      %2412 = vmatprep.mubr.f32.mxu0 %v2154
      %2413 = vmatmul.mubr.f32.gmra.mxu0 %v2142
      %v2414 = vpop.f32.mrf.mxu0
      %v2415 = vadd.f32 %v2340, %v2414
      %v2416 = vpop.f32.mrf.mxu0
      %2417 = vdwg.mxu0
      %2418 = vmatprep.subr.mxu0 0.0
      %2419 = vmatpush1.msra.mxu0 %v1552
      %2420 = vmatprep.subr.mxu0 0.0
      %2421 = vmatpush1.msra.mxu0 %v1551
      %2422 = vmatprep.subr.mxu0 0.0
      %2423 = vmatpush1.msra.mxu0 %v1550
      %2424 = vmatprep.subr.mxu0 0.0
      %2425 = vmatpush1.msra.mxu0 %v1549
      %2426 = vmatprep.subr.mxu0 0.0
      %2427 = vmatpush1.msra.mxu0 %v1548
      %2428 = vmatprep.subr.mxu0 0.0
      %2429 = vmatpush1.msra.mxu0 %v1547
      %2430 = vmatprep.subr.mxu0 0.0
      %2431 = vmatpush1.msra.mxu0 %v1546
      %2432 = vmatprep.subr.mxu0 0.0
      %2433 = vmatpush1.msra.mxu0 %v1545
      %2434 = vmatprep.subr.mxu0 0.0
      %2435 = vmatpush1.msra.mxu0 %v1544
      %2436 = vmatprep.subr.mxu0 0.0
      %2437 = vmatpush1.msra.mxu0 %v1543
      %2438 = vmatprep.subr.mxu0 0.0
      %2439 = vmatpush1.msra.mxu0 %v1542
      %2440 = vmatprep.subr.mxu0 0.0
      %2441 = vmatpush1.msra.mxu0 %v1541
      %2442 = vmatprep.subr.mxu0 0.0
      %2443 = vmatpush1.msra.mxu0 %v1540
      %2444 = vmatprep.subr.mxu0 0.0
      %2445 = vmatpush1.msra.mxu0 %v1539
      %2446 = vmatprep.subr.mxu0 0.0
      %2447 = vmatpush1.msra.mxu0 %v1538
      %2448 = vmatprep.subr.mxu0 0.0
      %2449 = vmatpush1.msra.mxu0 %v1537
      %2450 = vmatprep.subr.mxu0 0.0
      %2451 = vmatpush2.msra.mxu0 %v1568
      %2452 = vmatprep.subr.mxu0 0.0
      %2453 = vmatpush2.msra.mxu0 %v1567
      %2454 = vmatprep.subr.mxu0 0.0
      %2455 = vmatpush2.msra.mxu0 %v1566
      %2456 = vmatprep.subr.mxu0 0.0
      %2457 = vmatpush2.msra.mxu0 %v1565
      %2458 = vmatprep.subr.mxu0 0.0
      %2459 = vmatpush2.msra.mxu0 %v1564
      %2460 = vmatprep.subr.mxu0 0.0
      %2461 = vmatpush2.msra.mxu0 %v1563
      %2462 = vmatprep.subr.mxu0 0.0
      %2463 = vmatpush2.msra.mxu0 %v1562
      %2464 = vmatprep.subr.mxu0 0.0
      %2465 = vmatpush2.msra.mxu0 %v1561
      %2466 = vmatprep.subr.mxu0 0.0
      %2467 = vmatpush2.msra.mxu0 %v1560
      %2468 = vmatprep.subr.mxu0 0.0
      %2469 = vmatpush2.msra.mxu0 %v1559
      %2470 = vmatprep.subr.mxu0 0.0
      %2471 = vmatpush2.msra.mxu0 %v1558
      %2472 = vmatprep.subr.mxu0 0.0
      %2473 = vmatpush2.msra.mxu0 %v1557
      %2474 = vmatprep.subr.mxu0 0.0
      %2475 = vmatpush2.msra.mxu0 %v1556
      %2476 = vmatprep.subr.mxu0 0.0
      %2477 = vmatpush2.msra.mxu0 %v1555
      %2478 = vmatprep.subr.mxu0 0.0
      %2479 = vmatpush2.msra.mxu0 %v1554
      %2480 = vmatprep.subr.mxu0 0.0
      %2481 = vmatpush2.msra.mxu0 %v1553
      %2482 = vmatprep.mubr.f32.mxu0 %v2177
      %2483 = vmatmul.mubr.f32.gmra.mxu0 %v2159
      %v2484 = vpop.f32.mrf.mxu0
      %v2485 = vadd.f32 %v2410, %v2484
      %v2486 = vpop.f32.mrf.mxu0
      %2487 = vmatprep.mubr.f32.mxu0 %v2178
      %2488 = vmatmul.mubr.f32.gmra.mxu0 %v2161
      %v2489 = vpop.f32.mrf.mxu0
      %v2490 = vadd.f32 %v2415, %v2489
      %v2491 = vpop.f32.mrf.mxu0
      %2492 = vdwg.mxu0
      %2493 = vmatprep.subr.mxu0 0.0
      %2494 = vmatpush1.msra.mxu0 %v1584
      %2495 = vmatprep.subr.mxu0 0.0
      %2496 = vmatpush1.msra.mxu0 %v1583
      %2497 = vmatprep.subr.mxu0 0.0
      %2498 = vmatpush1.msra.mxu0 %v1582
      %2499 = vmatprep.subr.mxu0 0.0
      %2500 = vmatpush1.msra.mxu0 %v1581
      %2501 = vmatprep.subr.mxu0 0.0
      %2502 = vmatpush1.msra.mxu0 %v1580
      %2503 = vmatprep.subr.mxu0 0.0
      %2504 = vmatpush1.msra.mxu0 %v1579
      %2505 = vmatprep.subr.mxu0 0.0
      %2506 = vmatpush1.msra.mxu0 %v1578
      %2507 = vmatprep.subr.mxu0 0.0
      %2508 = vmatpush1.msra.mxu0 %v1577
      %2509 = vmatprep.subr.mxu0 0.0
      %2510 = vmatpush1.msra.mxu0 %v1576
      %2511 = vmatprep.subr.mxu0 0.0
      %2512 = vmatpush1.msra.mxu0 %v1575
      %2513 = vmatprep.subr.mxu0 0.0
      %2514 = vmatpush1.msra.mxu0 %v1574
      %2515 = vmatprep.subr.mxu0 0.0
      %2516 = vmatpush1.msra.mxu0 %v1573
      %2517 = vmatprep.subr.mxu0 0.0
      %2518 = vmatpush1.msra.mxu0 %v1572
      %2519 = vmatprep.subr.mxu0 0.0
      %2520 = vmatpush1.msra.mxu0 %v1571
      %2521 = vmatprep.subr.mxu0 0.0
      %2522 = vmatpush1.msra.mxu0 %v1570
      %2523 = vmatprep.subr.mxu0 0.0
      %2524 = vmatpush1.msra.mxu0 %v1569
      %2525 = vmatprep.subr.mxu0 0.0
      %2526 = vmatpush2.msra.mxu0 0.0
      %2527 = vmatprep.subr.mxu0 0.0
      %2528 = vmatpush2.msra.mxu0 0.0
      %2529 = vmatprep.subr.mxu0 0.0
      %2530 = vmatpush2.msra.mxu0 0.0
      %2531 = vmatprep.subr.mxu0 0.0
      %2532 = vmatpush2.msra.mxu0 0.0
      %2533 = vmatprep.subr.mxu0 0.0
      %2534 = vmatpush2.msra.mxu0 0.0
      %2535 = vmatprep.subr.mxu0 0.0
      %2536 = vmatpush2.msra.mxu0 0.0
      %2537 = vmatprep.subr.mxu0 0.0
      %2538 = vmatpush2.msra.mxu0 0.0
      %2539 = vmatprep.subr.mxu0 0.0
      %2540 = vmatpush2.msra.mxu0 0.0
      %2541 = vmatprep.subr.mxu0 0.0
      %2542 = vmatpush2.msra.mxu0 0.0
      %2543 = vmatprep.subr.mxu0 0.0
      %2544 = vmatpush2.msra.mxu0 0.0
      %2545 = vmatprep.subr.mxu0 0.0
      %2546 = vmatpush2.msra.mxu0 0.0
      %2547 = vmatprep.subr.mxu0 0.0
      %2548 = vmatpush2.msra.mxu0 0.0
      %2549 = vmatprep.subr.mxu0 0.0
      %2550 = vmatpush2.msra.mxu0 0.0
      %2551 = vmatprep.subr.mxu0 0.0
      %2552 = vmatpush2.msra.mxu0 0.0
      %2553 = vmatprep.subr.mxu0 0.0
      %2554 = vmatpush2.msra.mxu0 0.0
      %2555 = vmatprep.subr.mxu0 0.0
      %2556 = vmatpush2.msra.mxu0 0.0
      %2557 = vmatprep.mubr.f32.mxu0 0.0
      %2558 = vmatmul.mubr.f32.gmra.mxu0 %v2189
      %v2559 = vpop.f32.mrf.mxu0
      %v2560 = vadd.f32 %v2485, %v2559
      %v2561 = vpop.f32.mrf.mxu0
      %2562 = vmatprep.mubr.f32.mxu0 0.0
      %2563 = vmatmul.mubr.f32.gmra.mxu0 %v2190
      %v2564 = vpop.f32.mrf.mxu0
      %v2565 = vadd.f32 %v2490, %v2564
      %v2566 = vpop.f32.mrf.mxu0
      %2567 = vdwg.mxu0
      %v2568 = vmax.f32 %v2560, 0.0
      %v2569 = vmax.f32 %v2565, 0.0
      %2570 = vst [vmem:[%s224] sm:$0xff] %v2568
      %2571 = vst [vmem:[%s224 + $0x8] sm:$0xff] %v2569
      %s2572 = smul.u32 2, %s16
      %p2573 = scmp.lt.s32.totalorder %s2572, 3
      %s2574 = scalar_select %p2573, %s2572, 3
      %s2575 = smul.addr %s2574, 8
      %s2576 = scalar_lea.vmem %s5, %s2575
      // Predicated region
      $region41: #{residual_stack_forward.1} parent=39 // pred_check
        %p2577 = pneg %p144
      $region42: #{residual_stack_forward.1} parent=39 // pred_check_branch
        %2579 = sbr.rel (%p2577) target = $region44
      $region43: #{residual_stack_forward.1} parent=39 // pred_region
        %s2580 = smul.u32 2, %s16
      $region44: #{residual_stack_forward.1} parent=39 // pred_fallthru
        _
    $region40: #{residual_stack_forward.1} parent=5 // pred_fallthru
      _
    %p2581 = scmp.le.s32.totalorder 2, %s11
    // Predicated region
    $region45: #{residual_stack_forward.1} parent=5 // pred_check
      %p2582 = pneg %p2581
    $region46: #{residual_stack_forward.1} parent=5 // pred_check_branch
      %2584 = sbr.rel (%p2582) target = $region48
    $region47: #{residual_stack_forward.1} parent=5 // pred_region
      %s2585 = ssub.s32 %s11, 2
      // Predicated region
      $region49: #{residual_stack_forward.1} parent=47 // pred_check
        %p2586 = pneg %p150
      $region50: #{residual_stack_forward.1} parent=47 // pred_check_branch
        %2588 = sbr.rel (%p2586) target = $region52
      $region51: #{residual_stack_forward.1} parent=47 // pred_region
        %s2589 = smul.u32 2, %s17
        %p2590 = scmp.lt.s32.totalorder %s2589, 3
        %s2591 = scalar_select %p2590, %s2589, 3
        %s2592 = smul.addr %s2591, 8
        %s2593 = scalar_lea.vmem %s5, %s2592
      $region52: #{residual_stack_forward.1} parent=47 // pred_fallthru
        _
    $region48: #{residual_stack_forward.1} parent=5 // pred_fallthru
      _
  $region6: #{residual_stack_forward.1} parent=0 // loop_footer
    %s15 = sadd.s32 1, %s11
  $region7: #{residual_stack_forward.1} parent=0 // loop_footer_branch
    %10 = sbr.rel target = $region3
  $region8: #{residual_stack_forward.1} parent=0 // loop_exit
    _

</llo_original>
